<compile_context>
chip_gen: v7x
topology: tpu7x:2x2x1
jax: 0.10.0
libtpu: 0.0.40
codegen_flags: <defaults>
</compile_context>

<pallas_src>
import jax
import jax.numpy as jnp
from jax.experimental import pallas as pl
from jax.experimental.pallas import tpu as pltpu

EPS = 1e-5
HIDDEN = 1024
N_OUT = 10
N_OUT_PAD = 128  # lane-dense head width; sliced back to N_OUT in the wrapper


def _mlp_bn_kernel(x_ref, w1_ref, vec_ref, w2_hbm, w3_hbm,   # inputs
                   out_ref,                                   # output
                   w2_vmem, w3_vmem, sem):                    # scratch
    # Kick off the big layer-2 / head weight transfers immediately so they
    # overlap block-1 compute (these DMAs are the dominant cost of the kernel).
    w2_cp = pltpu.make_async_copy(w2_hbm, w2_vmem, sem.at[0])
    w2_cp.start()
    w3_cp = pltpu.make_async_copy(w3_hbm, w3_vmem, sem.at[1])
    w3_cp.start()

    # Tiny activation cast (batch x in_dim) so the MXU sees bf16 x bf16.
    x = x_ref[...].astype(jnp.bfloat16)

    # Packed per-layer vectors: row 0 = gamma1, 1 = beta1, 2 = gamma2,
    # 3 = beta2, 4 = zero-padded b3 (first N_OUT_PAD lanes). Rows 5-7 are
    # layout padding (sublane tile of 8).
    g1, be1 = vec_ref[0:1, :], vec_ref[1:2, :]
    g2, be2 = vec_ref[2:3, :], vec_ref[3:4, :]
    b3 = vec_ref[4:5, :N_OUT_PAD]

    def bn_relu(h, g, be):
        # Training-mode BN: biased variance over the batch axis, single pass.
        mu = jnp.mean(h, axis=0, keepdims=True)
        var = jnp.mean(h * h, axis=0, keepdims=True) - mu * mu
        return jnp.maximum((h - mu) * (jax.lax.rsqrt(var + EPS) * g) + be, 0.0)

    # ---- block 1: Linear(in_dim,1024) -> BN -> ReLU ----
    # (Linear bias omitted: exactly cancelled by the BN mean subtraction.)
    h = jnp.dot(x, w1_ref[...], preferred_element_type=jnp.float32)
    h = bn_relu(h, g1, be1)

    # ---- block 2: Linear(1024,1024) -> BN -> ReLU ----
    w2_cp.wait()
    h = jnp.dot(h.astype(jnp.bfloat16), w2_vmem[...],
                preferred_element_type=jnp.float32)
    h = bn_relu(h, g2, be2)

    # ---- head: Linear(1024, 10), lane-padded to 128 ----
    w3_cp.wait()
    out_ref[...] = (jnp.dot(h.astype(jnp.bfloat16), w3_vmem[...],
                            preferred_element_type=jnp.float32)
                    + b3).astype(out_ref.dtype)


def classification_net_forward(x, params):
    """x: (batch, in_dim) f32. Returns (batch, 10) f32."""
    batch = x.shape[0]

    vmem = pl.BlockSpec(memory_space=pltpu.MemorySpace.VMEM)
    hbm = pl.BlockSpec(memory_space=pl.ANY)   # leave in place; kernel DMAs it

    # Single grid point: this runs on one TensorCore.  If serving many
    # independent requests, add a leading "parallel" grid axis over requests
    # to use both TCs on v7x (do not split one BN batch across cores).
    out_pad = pl.pallas_call(
        _mlp_bn_kernel,
        out_shape=jax.ShapeDtypeStruct((batch, N_OUT_PAD), jnp.float32),
        in_specs=[vmem, vmem, vmem, hbm, hbm],
        out_specs=vmem,
        scratch_shapes=[
            pltpu.VMEM((HIDDEN, HIDDEN), jnp.bfloat16),     # w2 landing buffer
            pltpu.VMEM((HIDDEN, N_OUT_PAD), jnp.bfloat16),  # w3 landing buffer
            pltpu.SemaphoreType.DMA((2,)),
        ],
        compiler_params=pltpu.CompilerParams(vmem_limit_bytes=16 << 20),
    )(x, params["w1"], params["vec"], params["w2"], params["w3"])

    return out_pad[:, :N_OUT]


def init_params(key, in_dim, hidden=HIDDEN, n_out=N_OUT):
    """PyTorch-default init: Linear W,b ~ U(-1/sqrt(fan_in), +1/sqrt(fan_in)),
    BN gamma=1, beta=0.  Weights stored bf16; vectors packed into one f32 array.
    b1/b2 are not materialized: under training-mode BN any per-feature bias
    before the norm is exactly cancelled by the batch-mean subtraction."""
    ks = jax.random.split(key, 6)

    def lin_w(kw, fan_in, fan_out):
        bound = 1.0 / jnp.sqrt(jnp.float32(fan_in))
        return jax.random.uniform(kw, (fan_in, fan_out), jnp.float32, -bound, bound)

    def lin_b(kb, fan_in, fan_out):
        bound = 1.0 / jnp.sqrt(jnp.float32(fan_in))
        return jax.random.uniform(kb, (fan_out,), jnp.float32, -bound, bound)

    w1 = lin_w(ks[0], in_dim, hidden)
    w2 = lin_w(ks[2], hidden, hidden)
    w3 = lin_w(ks[4], hidden, n_out)
    b3 = lin_b(ks[5], hidden, n_out)

    # Lane-pad the head to 128 output columns (extra columns are exact zeros).
    w3_pad = jnp.zeros((hidden, N_OUT_PAD), jnp.float32).at[:, :n_out].set(w3)

    # Pack BN / head-bias vectors into one (8, hidden) f32 array
    # (one (8,128)-tiled DMA; rows 5-7 are layout padding).
    vec = jnp.zeros((8, hidden), jnp.float32)
    vec = vec.at[0].set(jnp.ones((hidden,), jnp.float32))   # gamma1
    #      row 1 = beta1 = 0
    vec = vec.at[2].set(jnp.ones((hidden,), jnp.float32))   # gamma2
    #      row 3 = beta2 = 0
    vec = vec.at[4, :n_out].set(b3)                         # b3 (lane-padded)

    return dict(
        w1=w1.astype(jnp.bfloat16),
        w2=w2.astype(jnp.bfloat16),
        w3=w3_pad.astype(jnp.bfloat16),
        vec=vec,
    )


def _reference(x, p):
    """Pure-JAX reference (training-mode BN) using the same bf16 weights and
    the same bf16 activation casts as the kernel (two-pass variance)."""
    w1, w2 = p["w1"], p["w2"]
    w3 = p["w3"][:, :N_OUT]
    vec = p["vec"]
    g1, be1 = vec[0], vec[1]
    g2, be2 = vec[2], vec[3]
    b3 = vec[4, :N_OUT]

    def bn_relu(h, g, be):
        mu = jnp.mean(h, axis=0, keepdims=True)
        var = jnp.mean((h - mu) ** 2, axis=0, keepdims=True)
        return jnp.maximum((h - mu) / jnp.sqrt(var + EPS) * g + be, 0.0)

    h = jnp.dot(x.astype(jnp.bfloat16), w1, preferred_element_type=jnp.float32)
    h = bn_relu(h, g1, be1)
    h = jnp.dot(h.astype(jnp.bfloat16), w2, preferred_element_type=jnp.float32)
    h = bn_relu(h, g2, be2)
    return jnp.dot(h.astype(jnp.bfloat16), w3,
                   preferred_element_type=jnp.float32) + b3


if __name__ == "__main__":
    key = jax.random.PRNGKey(0)
    k_x, k_p = jax.random.split(key)

    batch, in_dim = 8, 32            # small demo shapes; head is Linear(1024, 10)
    x = jax.random.normal(k_x, (batch, in_dim), jnp.float32)
    params = init_params(k_p, in_dim)

    out = jax.block_until_ready(classification_net_forward(x, params))
    ref = _reference(x, params)

    assert out.shape == (batch, N_OUT), out.shape
    assert jnp.allclose(out, ref, atol=2e-3, rtol=2e-3), \
        f"mismatch vs reference, max abs err = {float(jnp.max(jnp.abs(out - ref)))}"

    print("KERNEL_OK")
</pallas_src>

<mosaic_0001>
module attributes {stable_mosaic.version = 11 : i64} {
  func.func @_mlp_bn_kernel(%arg0: memref<8x32xf32, #tpu.memory_space<vmem>>, %arg1: memref<32x1024xbf16, #tpu.memory_space<vmem>>, %arg2: memref<8x1024xf32, #tpu.memory_space<vmem>>, %arg3: memref<1024x1024xbf16, #tpu.memory_space<any>>, %arg4: memref<1024x128xbf16, #tpu.memory_space<any>>, %arg5: memref<8x128xf32, #tpu.memory_space<vmem>>, %arg6: memref<1024x1024xbf16, #tpu.memory_space<vmem>>, %arg7: memref<1024x128xbf16, #tpu.memory_space<vmem>>, %arg8: memref<2x!tpu.dma_semaphore, #tpu.memory_space<semaphore_mem>>) attributes {dimension_semantics = [], scalar_prefetch = 0 : i64, scratch_operands = 3 : i64, tpu.core_type = #tpu.core_type<tc>} {
    %c0_i32 = arith.constant 0 : i32
    %0 = tpu.memref_slice %arg8[%c0_i32] : memref<2x!tpu.dma_semaphore, #tpu.memory_space<semaphore_mem>> -> memref<1x!tpu.dma_semaphore, #tpu.memory_space<semaphore_mem>>
    %1 = tpu.memref_squeeze %0 : memref<1x!tpu.dma_semaphore, #tpu.memory_space<semaphore_mem>> -> memref<!tpu.dma_semaphore, #tpu.memory_space<semaphore_mem>>
    tpu.enqueue_dma source(%arg3 : memref<1024x1024xbf16, #tpu.memory_space<any>>) target(%arg6 : memref<1024x1024xbf16, #tpu.memory_space<vmem>>) target_semaphore(%1 : memref<!tpu.dma_semaphore, #tpu.memory_space<semaphore_mem>>)
    %c1_i32 = arith.constant 1 : i32
    %2 = tpu.memref_slice %arg8[%c1_i32] : memref<2x!tpu.dma_semaphore, #tpu.memory_space<semaphore_mem>> -> memref<1x!tpu.dma_semaphore, #tpu.memory_space<semaphore_mem>>
    %3 = tpu.memref_squeeze %2 : memref<1x!tpu.dma_semaphore, #tpu.memory_space<semaphore_mem>> -> memref<!tpu.dma_semaphore, #tpu.memory_space<semaphore_mem>>
    tpu.enqueue_dma source(%arg4 : memref<1024x128xbf16, #tpu.memory_space<any>>) target(%arg7 : memref<1024x128xbf16, #tpu.memory_space<vmem>>) target_semaphore(%3 : memref<!tpu.dma_semaphore, #tpu.memory_space<semaphore_mem>>)
    %c0 = arith.constant 0 : index
    %c0_0 = arith.constant 0 : index
    %4 = vector.load %arg0[%c0, %c0_0] : memref<8x32xf32, #tpu.memory_space<vmem>>, vector<8x32xf32>
    %5 = arith.truncf %4 : vector<8x32xf32> to vector<8x32xbf16>
    %c0_1 = arith.constant 0 : index
    %c0_2 = arith.constant 0 : index
    %6 = vector.load %arg2[%c0_1, %c0_2] : memref<8x1024xf32, #tpu.memory_space<vmem>>, vector<1x1024xf32>
    %c1 = arith.constant 1 : index
    %c0_3 = arith.constant 0 : index
    %7 = vector.load %arg2[%c1, %c0_3] : memref<8x1024xf32, #tpu.memory_space<vmem>>, vector<1x1024xf32>
    %c2 = arith.constant 2 : index
    %c0_4 = arith.constant 0 : index
    %8 = vector.load %arg2[%c2, %c0_4] : memref<8x1024xf32, #tpu.memory_space<vmem>>, vector<1x1024xf32>
    %c3 = arith.constant 3 : index
    %c0_5 = arith.constant 0 : index
    %9 = vector.load %arg2[%c3, %c0_5] : memref<8x1024xf32, #tpu.memory_space<vmem>>, vector<1x1024xf32>
    %c4 = arith.constant 4 : index
    %c0_6 = arith.constant 0 : index
    %10 = vector.load %arg2[%c4, %c0_6] : memref<8x1024xf32, #tpu.memory_space<vmem>>, vector<1x128xf32>
    %c0_7 = arith.constant 0 : index
    %c0_8 = arith.constant 0 : index
    %11 = vector.load %arg1[%c0_7, %c0_8] : memref<32x1024xbf16, #tpu.memory_space<vmem>>, vector<32x1024xbf16>
    %cst = arith.constant dense<0.000000e+00> : vector<8x1024xf32>
    %12 = tpu.matmul %5, %11, %cst {dimension_numbers = #tpu.dot_dimension_numbers<[1], [0], [0], [1], [0, 0, 1, 1], [], []>} : vector<8x32xbf16>, vector<32x1024xbf16>, vector<8x1024xf32> -> vector<8x1024xf32>
    %cst_9 = arith.constant dense<0.000000e+00> : vector<1024xf32>
    %13 = vector.multi_reduction <add>, %12, %cst_9 [0] : vector<8x1024xf32> to vector<1024xf32>
    %14 = vector.shape_cast %13 : vector<1024xf32> to vector<1x1024xf32>
    %cst_10 = arith.constant 8.000000e+00 : f32
    %15 = vector.broadcast %cst_10 : f32 to vector<1x1024xf32>
    %16 = arith.divf %14, %15 : vector<1x1024xf32>
    %17 = arith.mulf %12, %12 : vector<8x1024xf32>
    %cst_11 = arith.constant dense<0.000000e+00> : vector<1024xf32>
    %18 = vector.multi_reduction <add>, %17, %cst_11 [0] : vector<8x1024xf32> to vector<1024xf32>
    %19 = vector.shape_cast %18 : vector<1024xf32> to vector<1x1024xf32>
    %cst_12 = arith.constant 8.000000e+00 : f32
    %20 = vector.broadcast %cst_12 : f32 to vector<1x1024xf32>
    %21 = arith.divf %19, %20 : vector<1x1024xf32>
    %22 = arith.mulf %16, %16 : vector<1x1024xf32>
    %23 = arith.subf %21, %22 : vector<1x1024xf32>
    %24 = vector.broadcast %16 : vector<1x1024xf32> to vector<8x1024xf32>
    %25 = arith.subf %12, %24 : vector<8x1024xf32>
    %cst_13 = arith.constant 9.99999974E-6 : f32
    %26 = vector.broadcast %cst_13 : f32 to vector<1x1024xf32>
    %27 = arith.addf %23, %26 : vector<1x1024xf32>
    %28 = math.rsqrt %27 : vector<1x1024xf32>
    %29 = arith.mulf %28, %6 : vector<1x1024xf32>
    %30 = vector.broadcast %29 : vector<1x1024xf32> to vector<8x1024xf32>
    %31 = arith.mulf %25, %30 : vector<8x1024xf32>
    %32 = vector.broadcast %7 : vector<1x1024xf32> to vector<8x1024xf32>
    %33 = arith.addf %31, %32 : vector<8x1024xf32>
    %cst_14 = arith.constant 0.000000e+00 : f32
    %34 = vector.broadcast %cst_14 : f32 to vector<8x1024xf32>
    %35 = arith.maximumf %33, %34 : vector<8x1024xf32>
    %c0_i32_15 = arith.constant 0 : i32
    %36 = tpu.memref_slice %arg8[%c0_i32_15] : memref<2x!tpu.dma_semaphore, #tpu.memory_space<semaphore_mem>> -> memref<1x!tpu.dma_semaphore, #tpu.memory_space<semaphore_mem>>
    %37 = tpu.memref_squeeze %36 : memref<1x!tpu.dma_semaphore, #tpu.memory_space<semaphore_mem>> -> memref<!tpu.dma_semaphore, #tpu.memory_space<semaphore_mem>>
    tpu.wait_dma2 semaphore(%37 : memref<!tpu.dma_semaphore, #tpu.memory_space<semaphore_mem>>) src(%arg3 : memref<1024x1024xbf16, #tpu.memory_space<any>>) dst(%arg6 : memref<1024x1024xbf16, #tpu.memory_space<vmem>>)
    %38 = arith.truncf %35 : vector<8x1024xf32> to vector<8x1024xbf16>
    %c0_16 = arith.constant 0 : index
    %c0_17 = arith.constant 0 : index
    %39 = vector.load %arg6[%c0_16, %c0_17] : memref<1024x1024xbf16, #tpu.memory_space<vmem>>, vector<1024x1024xbf16>
    %cst_18 = arith.constant dense<0.000000e+00> : vector<8x1024xf32>
    %40 = tpu.matmul %38, %39, %cst_18 {dimension_numbers = #tpu.dot_dimension_numbers<[1], [0], [0], [1], [0, 0, 1, 1], [], []>} : vector<8x1024xbf16>, vector<1024x1024xbf16>, vector<8x1024xf32> -> vector<8x1024xf32>
    %cst_19 = arith.constant dense<0.000000e+00> : vector<1024xf32>
    %41 = vector.multi_reduction <add>, %40, %cst_19 [0] : vector<8x1024xf32> to vector<1024xf32>
    %42 = vector.shape_cast %41 : vector<1024xf32> to vector<1x1024xf32>
    %cst_20 = arith.constant 8.000000e+00 : f32
    %43 = vector.broadcast %cst_20 : f32 to vector<1x1024xf32>
    %44 = arith.divf %42, %43 : vector<1x1024xf32>
    %45 = arith.mulf %40, %40 : vector<8x1024xf32>
    %cst_21 = arith.constant dense<0.000000e+00> : vector<1024xf32>
    %46 = vector.multi_reduction <add>, %45, %cst_21 [0] : vector<8x1024xf32> to vector<1024xf32>
    %47 = vector.shape_cast %46 : vector<1024xf32> to vector<1x1024xf32>
    %cst_22 = arith.constant 8.000000e+00 : f32
    %48 = vector.broadcast %cst_22 : f32 to vector<1x1024xf32>
    %49 = arith.divf %47, %48 : vector<1x1024xf32>
    %50 = arith.mulf %44, %44 : vector<1x1024xf32>
    %51 = arith.subf %49, %50 : vector<1x1024xf32>
    %52 = vector.broadcast %44 : vector<1x1024xf32> to vector<8x1024xf32>
    %53 = arith.subf %40, %52 : vector<8x1024xf32>
    %cst_23 = arith.constant 9.99999974E-6 : f32
    %54 = vector.broadcast %cst_23 : f32 to vector<1x1024xf32>
    %55 = arith.addf %51, %54 : vector<1x1024xf32>
    %56 = math.rsqrt %55 : vector<1x1024xf32>
    %57 = arith.mulf %56, %8 : vector<1x1024xf32>
    %58 = vector.broadcast %57 : vector<1x1024xf32> to vector<8x1024xf32>
    %59 = arith.mulf %53, %58 : vector<8x1024xf32>
    %60 = vector.broadcast %9 : vector<1x1024xf32> to vector<8x1024xf32>
    %61 = arith.addf %59, %60 : vector<8x1024xf32>
    %cst_24 = arith.constant 0.000000e+00 : f32
    %62 = vector.broadcast %cst_24 : f32 to vector<8x1024xf32>
    %63 = arith.maximumf %61, %62 : vector<8x1024xf32>
    %c1_i32_25 = arith.constant 1 : i32
    %64 = tpu.memref_slice %arg8[%c1_i32_25] : memref<2x!tpu.dma_semaphore, #tpu.memory_space<semaphore_mem>> -> memref<1x!tpu.dma_semaphore, #tpu.memory_space<semaphore_mem>>
    %65 = tpu.memref_squeeze %64 : memref<1x!tpu.dma_semaphore, #tpu.memory_space<semaphore_mem>> -> memref<!tpu.dma_semaphore, #tpu.memory_space<semaphore_mem>>
    tpu.wait_dma2 semaphore(%65 : memref<!tpu.dma_semaphore, #tpu.memory_space<semaphore_mem>>) src(%arg4 : memref<1024x128xbf16, #tpu.memory_space<any>>) dst(%arg7 : memref<1024x128xbf16, #tpu.memory_space<vmem>>)
    %66 = arith.truncf %63 : vector<8x1024xf32> to vector<8x1024xbf16>
    %c0_26 = arith.constant 0 : index
    %c0_27 = arith.constant 0 : index
    %67 = vector.load %arg7[%c0_26, %c0_27] : memref<1024x128xbf16, #tpu.memory_space<vmem>>, vector<1024x128xbf16>
    %cst_28 = arith.constant dense<0.000000e+00> : vector<8x128xf32>
    %68 = tpu.matmul %66, %67, %cst_28 {dimension_numbers = #tpu.dot_dimension_numbers<[1], [0], [0], [1], [0, 0, 1, 1], [], []>} : vector<8x1024xbf16>, vector<1024x128xbf16>, vector<8x128xf32> -> vector<8x128xf32>
    %69 = vector.broadcast %10 : vector<1x128xf32> to vector<8x128xf32>
    %70 = arith.addf %68, %69 : vector<8x128xf32>
    %c0_29 = arith.constant 0 : index
    %c0_30 = arith.constant 0 : index
    %71 = vector.load %arg5[%c0_29, %c0_30] : memref<8x128xf32, #tpu.memory_space<vmem>>, vector<8x128xf32>
    tpu.vector_store %arg5[%c0_29, %c0_30], %70 {strides = array<i32>} : memref<8x128xf32, #tpu.memory_space<vmem>>, vector<8x128xf32>,
    return
  }
}

</mosaic_0001>

<llo_original>
// kernel: tpu_custom_call.1
$region0: #{tpu_custom_call.1}
  #allocation0 [shape = 'u32[]', space=smem, size = 0x4, offset = 0x4, fixed_abs, tag = 'smem constant byte address 0x4 - core index']
  #allocation1 [shape = 'u32[144,128]{1,0:T(1,128)}', space=vmem, size = 0x12000, scoped, tag = 'internal scratch']
  #allocation2 [shape = 'bf16[1024,1024]{1,0:T(16,128)(2,1)}', space=vmem, size = 0x200000, scoped, tag = 'scratch operand']
  #allocation3 [shape = 'bf16[1024,128]{1,0:T(16,128)(2,1)}', space=vmem, size = 0x40000, scoped, tag = 'scratch operand']
  #allocation4 [shape = 's32[2]{0}', space=sflag, size = 0x8, scoped, tag = 'scratch operand']
  #allocation12 [shape = 's32[]', space=sflag, size = 0x4, offset = 0, fixed_abs, tag = 'sflag constant byte address 0x0 - dummy sync flag']
  #allocation14 [shape = 's32[]', space=sflag, size = 0x4, offset = 0, fixed_abs, tag = 'sflag constant byte address 0x0 - dummy sync flag']
  #allocation15 [shape = 's32[]', space=sflag, size = 0x4, offset = 0, fixed_abs, tag = 'sflag constant byte address 0x0 - dummy sync flag']
  #allocation16 [shape = 'u32[]', space=smem, size = 0x4, offset = 0x44, fixed_abs, tag = 'smem constant byte address 0x44 - assertion arg 0']
  #allocation17 [shape = 'u32[]', space=smem, size = 0x4, offset = 0x48, fixed_abs, tag = 'smem constant byte address 0x48 - assertion arg 1']
  %s0 = inlined_call_operand.hbm [shape: f32[8,32], index: 0, kind: input, shape index: {}]
  %s1 = inlined_call_operand.hbm [shape: bf16[32,1024], index: 1, kind: input, shape index: {}]
  %s2 = inlined_call_operand.hbm [shape: f32[8,1024], index: 2, kind: input, shape index: {}]
  %s3 = inlined_call_operand.hbm [shape: bf16[1024,1024], index: 3, kind: input, shape index: {}]
  %s4 = inlined_call_operand.hbm [shape: bf16[1024,128], index: 4, kind: input, shape index: {}]
  %s5 = inlined_call_operand.hbm [shape: f32[8,128], index: 5, kind: output, shape index: {}]
  %s6 = sld [smem:[#allocation0]]
  $region38: #{tpu_custom_call.1} parent=0
    _
  %s8 = ssub.s32 1, %s6
  %s9 = scalar_select 0, %s8, %s6
  $region1: #{tpu_custom_call.1} parent=0
    #allocation5 [shape = 'u8[4096]{0}', space=vmem, size = 0x1000, scoped, tag = 'input window, operand 0, single buffered']
    #allocation6 [shape = 's32[1]{0}', space=sflag, size = 0x4, scoped, tag = 'scoped memory for tpu_custom_call.1']
    #allocation7 [shape = 's32[1]{0}', space=sflag, size = 0x4, scoped, tag = 'scoped memory for tpu_custom_call.1']
    #allocation8 [shape = 'u8[65536]{0}', space=vmem, size = 0x10000, scoped, tag = 'input window, operand 1, single buffered']
    #allocation9 [shape = 's32[1]{0}', space=sflag, size = 0x4, scoped, tag = 'scoped memory for tpu_custom_call.1']
    #allocation10 [shape = 'u8[32768]{0}', space=vmem, size = 0x8000, scoped, tag = 'input window, operand 2, single buffered']
    #allocation11 [shape = 'u8[4096]{0}', space=vmem, size = 0x1000, scoped, tag = 'output window, operand 0, single buffered']
    #allocation13 [shape = 'u32[9]{0}', space=smem, size = 0x24, scoped, tag = 'DMA stride descriptor']
    %10 = vsyncpa [#allocation6], 0
    %11 = vsyncpa [#allocation9], 0
    %12 = vsyncpa [#allocation7], 0
    // Predicated region
    $region2: #{tpu_custom_call.1} parent=1 // pred_check
      _
    $region3: #{tpu_custom_call.1} parent=1 // pred_check_branch
      %14 = sbr.rel (0) target = $region5
    $region4: #{tpu_custom_call.1} parent=1 // pred_region
      %s16 = ssub.s32 128, 128
      %17 = vsyncadd [#allocation6], %s16
      %s19 = sshll.u32 [#allocation5], 4
      %s20 = int_to_ptr.vmem [resolvable:$true] %s19
      %22 = dma.hbm_to_vmem [thread:$0]  %s0, 128, %s20, [#allocation6]
    $region5: #{tpu_custom_call.1} parent=1 // pred_fallthru
      _
    // Predicated region
    $region6: #{tpu_custom_call.1} parent=1 // pred_check
      _
    $region7: #{tpu_custom_call.1} parent=1 // pred_check_branch
      %24 = sbr.rel (0) target = $region9
    $region8: #{tpu_custom_call.1} parent=1 // pred_region
      %s26 = ssub.s32 2048, 2048
      %27 = vsyncadd [#allocation9], %s26
      %s28 = sshll.u32 [#allocation8], 4
      %s29 = int_to_ptr.vmem [resolvable:$true] %s28
      %34 = dma.hbm_to_vmem [thread:$0]  %s1, 2048, %s29, [#allocation9], 512, 512, 32
    $region9: #{tpu_custom_call.1} parent=1 // pred_fallthru
      _
    // Predicated region
    $region10: #{tpu_custom_call.1} parent=1 // pred_check
      _
    $region11: #{tpu_custom_call.1} parent=1 // pred_check_branch
      %36 = sbr.rel (0) target = $region13
    $region12: #{tpu_custom_call.1} parent=1 // pred_region
      %s38 = ssub.s32 1024, 1024
      %39 = vsyncadd [#allocation9], %s38
      %s41 = sshll.u32 [#allocation10], 4
      %s42 = int_to_ptr.vmem [resolvable:$true] %s41
      %44 = dma.hbm_to_vmem [thread:$0]  %s2, 1024, %s42, [#allocation9]
    $region13: #{tpu_custom_call.1} parent=1 // pred_fallthru
      _
    // Predicated region
    $region14: #{tpu_custom_call.1} parent=1 // pred_check
      _
    $region15: #{tpu_custom_call.1} parent=1 // pred_check_branch
      %46 = sbr.rel (0) target = $region17
    $region16: #{tpu_custom_call.1} parent=1 // pred_region
      %47 = dma.done [#allocation6], 128
    $region17: #{tpu_custom_call.1} parent=1 // pred_fallthru
      _
    // Predicated region
    $region18: #{tpu_custom_call.1} parent=1 // pred_check
      _
    $region19: #{tpu_custom_call.1} parent=1 // pred_check_branch
      %49 = sbr.rel (0) target = $region21
    $region20: #{tpu_custom_call.1} parent=1 // pred_region
      %50 = dma.done [#allocation9], 2048
    $region21: #{tpu_custom_call.1} parent=1 // pred_fallthru
      _
    // Predicated region
    $region22: #{tpu_custom_call.1} parent=1 // pred_check
      _
    $region23: #{tpu_custom_call.1} parent=1 // pred_check_branch
      %52 = sbr.rel (0) target = $region25
    $region24: #{tpu_custom_call.1} parent=1 // pred_region
      %53 = dma.done [#allocation9], 1024
    $region25: #{tpu_custom_call.1} parent=1 // pred_fallthru
      _
    %s56 = sshll.u32 1, 14
    %s57 = sxor.u32 4294967295, %s56
    %s59 = sld [smem:[#allocation0]]
    %s60 = sadd.s32 2, %s59
    %s62 = sshll.u32 7, 26
    %s63 = sxor.u32 4294967295, %s62
    %s64 = sand.u32 0, %s63
    %s65 = sshll.u32 %s60, 26
    %s66 = sor.u32 %s64, %s65
    %s67 = sshll.u32 [#allocation2], 4
    %s68 = int_to_ptr.vmem [resolvable:$true] %s67
    %71 = sst [smem:[#allocation13]] 1024
    %s72 = scalar_lea.smem [#allocation13], 1
    %73 = sst [smem:[%s72]] 1024
    %s74 = scalar_lea.smem [#allocation13], 2
    %75 = sst [smem:[%s74]] 8
    %s76 = scalar_lea.smem [#allocation13], 3
    %77 = sst [smem:[%s76]] 64
    %s78 = scalar_lea.smem [#allocation13], 4
    %79 = sst [smem:[%s78]] 128
    %s80 = scalar_lea.smem [#allocation13], 5
    %81 = sst [smem:[%s80]] 2
    %s82 = scalar_lea.smem [#allocation13], 6
    %83 = sst [smem:[%s82]] 512
    %s84 = scalar_lea.smem [#allocation13], 7
    %85 = sst [smem:[%s84]] 64
    %s86 = scalar_lea.smem [#allocation13], 8
    %87 = sst [smem:[%s86]] 4
    %89 = dma.general %s3, 65536, %s68, [#allocation4], [#allocation12], [#allocation13], %s66, 0
    %s90 = scalar_lea.sflag [#allocation4], 1
    // Predicated region
    $region26: #{tpu_custom_call.1} parent=1 // pred_check
      _
    $region27: #{tpu_custom_call.1} parent=1 // pred_check_branch
      %92 = sbr.rel target = $region29
    $region28: #{tpu_custom_call.1} parent=1 // pred_region
      %93 = sst [smem:[#allocation16]] [#allocation15]
      %94 = sst [smem:[#allocation17]] [#allocation14]
    $region29: #{tpu_custom_call.1} parent=1 // pred_fallthru
      _
    %96 = shalt.err (0)
    %s98 = sshll.u32 [#allocation3], 4
    %s99 = int_to_ptr.vmem [resolvable:$true] %s98
    %101 = dma.hbm_to_vmem [thread:$0]  %s4, 8192, %s99, %s90
    %v102 = vld [vmem:[#allocation5] sm:$0xff]
    %v103 = vpack.c.bf16 %v102, %v102
    %v104 = vld [vmem:[#allocation10] ss:$8 sm:$0xf]
    %v105 = vld [vmem:[#allocation10] ss:$8 sm:$0xf0]
    %v106 = vor.u32 %v104, %v105
    %s107 = scalar_lea.vmem [#allocation10], 1
    %v108 = vld [vmem:[%s107] ss:$8 sm:$0xf]
    %v109 = vld [vmem:[%s107] ss:$8 sm:$0xf0]
    %v110 = vor.u32 %v108, %v109
    %s111 = scalar_lea.vmem [#allocation10], 2
    %v112 = vld [vmem:[%s111] ss:$8 sm:$0xf]
    %v113 = vld [vmem:[%s111] ss:$8 sm:$0xf0]
    %v114 = vor.u32 %v112, %v113
    %s115 = scalar_lea.vmem [#allocation10], 3
    %v116 = vld [vmem:[%s115] ss:$8 sm:$0xf]
    %v117 = vld [vmem:[%s115] ss:$8 sm:$0xf0]
    %v118 = vor.u32 %v116, %v117
    %v119 = vld [vmem:[#allocation10 + $0x4] ss:$0 sm:$0xff]
    %v120 = vld [vmem:[#allocation8] sm:$0xff]
    %v121 = vld [vmem:[#allocation8 + $0x8] sm:$0xff]
    %v122 = vld [vmem:[#allocation8 + $0x10] sm:$0xff]
    %v123 = vld [vmem:[#allocation8 + $0x18] sm:$0xff]
    %v124 = vld [vmem:[#allocation8 + $0x20] sm:$0xff]
    %v125 = vld [vmem:[#allocation8 + $0x28] sm:$0xff]
    %v126 = vld [vmem:[#allocation8 + $0x30] sm:$0xff]
    %v127 = vld [vmem:[#allocation8 + $0x38] sm:$0xff]
    %v128 = vld [vmem:[#allocation8 + $0x40] sm:$0xff]
    %v129 = vld [vmem:[#allocation8 + $0x48] sm:$0xff]
    %v130 = vld [vmem:[#allocation8 + $0x50] sm:$0xff]
    %v131 = vld [vmem:[#allocation8 + $0x58] sm:$0xff]
    %v132 = vld [vmem:[#allocation8 + $0x60] sm:$0xff]
    %v133 = vld [vmem:[#allocation8 + $0x68] sm:$0xff]
    %v134 = vld [vmem:[#allocation8 + $0x70] sm:$0xff]
    %v135 = vld [vmem:[#allocation8 + $0x78] sm:$0xff]
    %v152 = vunpack.c.l.b16 %v120
    %v153 = vunpack.c.h.b16 %v120
    %v154 = vunpack.c.l.b16 %v121
    %v155 = vunpack.c.h.b16 %v121
    %v156 = vunpack.c.l.b16 %v122
    %v157 = vunpack.c.h.b16 %v122
    %v158 = vunpack.c.l.b16 %v123
    %v159 = vunpack.c.h.b16 %v123
    %v160 = vunpack.c.l.b16 %v124
    %v161 = vunpack.c.h.b16 %v124
    %v162 = vunpack.c.l.b16 %v125
    %v163 = vunpack.c.h.b16 %v125
    %v164 = vunpack.c.l.b16 %v126
    %v165 = vunpack.c.h.b16 %v126
    %v166 = vunpack.c.l.b16 %v127
    %v167 = vunpack.c.h.b16 %v127
    %v168 = vunpack.c.l.b16 %v128
    %v169 = vunpack.c.h.b16 %v128
    %v170 = vunpack.c.l.b16 %v129
    %v171 = vunpack.c.h.b16 %v129
    %v172 = vunpack.c.l.b16 %v130
    %v173 = vunpack.c.h.b16 %v130
    %v174 = vunpack.c.l.b16 %v131
    %v175 = vunpack.c.h.b16 %v131
    %v176 = vunpack.c.l.b16 %v132
    %v177 = vunpack.c.h.b16 %v132
    %v178 = vunpack.c.l.b16 %v133
    %v179 = vunpack.c.h.b16 %v133
    %v180 = vunpack.c.l.b16 %v134
    %v181 = vunpack.c.h.b16 %v134
    %v182 = vunpack.c.l.b16 %v135
    %v183 = vunpack.c.h.b16 %v135
    %v184 = vpack.c.b16 %v160, %v152
    %v185 = vpack.c.b16 %v161, %v153
    %v186 = vpack.c.b16 %v162, %v154
    %v187 = vpack.c.b16 %v163, %v155
    %v188 = vpack.c.b16 %v164, %v156
    %v189 = vpack.c.b16 %v165, %v157
    %v190 = vpack.c.b16 %v166, %v158
    %v191 = vpack.c.b16 %v167, %v159
    %v192 = vpack.c.b16 %v176, %v168
    %v193 = vpack.c.b16 %v177, %v169
    %v194 = vpack.c.b16 %v178, %v170
    %v195 = vpack.c.b16 %v179, %v171
    %v196 = vpack.c.b16 %v180, %v172
    %v197 = vpack.c.b16 %v181, %v173
    %v198 = vpack.c.b16 %v182, %v174
    %v199 = vpack.c.b16 %v183, %v175
    %vm216 = vcmask 261120
    %v218 = vsel %vm216, %v103, 0
    %220 = vmatprep.subr.bf16.mxu0 %v185
    %221 = vmatpush1.bf16.msra.mxu0 %v184
    %222 = vmatprep.subr.bf16.mxu0 %v193
    %223 = vmatpush1.bf16.msra.mxu0 %v192
    %224 = vmatprep.subr.bf16.mxu0 0
    %225 = vmatpush1.bf16.msra.mxu0 0
    %226 = vmatprep.subr.bf16.mxu0 0
    %227 = vmatpush1.bf16.msra.mxu0 0
    %228 = vmatprep.subr.bf16.mxu0 0
    %229 = vmatpush1.bf16.msra.mxu0 0
    %230 = vmatprep.subr.bf16.mxu0 0
    %231 = vmatpush1.bf16.msra.mxu0 0
    %232 = vmatprep.subr.bf16.mxu0 0
    %233 = vmatpush1.bf16.msra.mxu0 0
    %234 = vmatprep.subr.bf16.mxu0 0
    %235 = vmatpush1.bf16.msra.mxu0 0
    %236 = vmatprep.subr.bf16.mxu0 0
    %237 = vmatpush1.bf16.msra.mxu0 0
    %238 = vmatprep.subr.bf16.mxu0 0
    %239 = vmatpush1.bf16.msra.mxu0 0
    %240 = vmatprep.subr.bf16.mxu0 0
    %241 = vmatpush1.bf16.msra.mxu0 0
    %242 = vmatprep.subr.bf16.mxu0 0
    %243 = vmatpush1.bf16.msra.mxu0 0
    %244 = vmatprep.subr.bf16.mxu0 0
    %245 = vmatpush1.bf16.msra.mxu0 0
    %246 = vmatprep.subr.bf16.mxu0 0
    %247 = vmatpush1.bf16.msra.mxu0 0
    %248 = vmatprep.subr.bf16.mxu0 0
    %249 = vmatpush1.bf16.msra.mxu0 0
    %250 = vmatprep.subr.bf16.mxu0 0
    %251 = vmatpush1.bf16.msra.mxu0 0
    %252 = vmatprep.mubr.bf16.mxu0 0
    %253 = vmatmul.mubr.bf16.gmra.mrb[0].mxu0 %v218
    %v254 = vpop.f32.mrb[0].mxu0
    %v255 = vadd.f32 0.0, %v254
    %v256 = vpop.f32.mrb[0].mxu0
    %v257 = vadd.f32 0.0, %v256
    %v258 = vpop.f32.mrb[0].mxu0
    %v259 = vpop.f32.mrb[0].mxu0
    %260 = vdwg.mxu0
    %261 = vmatprep.subr.bf16.mxu0 %v187
    %262 = vmatpush1.bf16.msra.mxu0 %v186
    %263 = vmatprep.subr.bf16.mxu0 %v195
    %264 = vmatpush1.bf16.msra.mxu0 %v194
    %265 = vmatprep.subr.bf16.mxu0 0
    %266 = vmatpush1.bf16.msra.mxu0 0
    %267 = vmatprep.subr.bf16.mxu0 0
    %268 = vmatpush1.bf16.msra.mxu0 0
    %269 = vmatprep.subr.bf16.mxu0 0
    %270 = vmatpush1.bf16.msra.mxu0 0
    %271 = vmatprep.subr.bf16.mxu0 0
    %272 = vmatpush1.bf16.msra.mxu0 0
    %273 = vmatprep.subr.bf16.mxu0 0
    %274 = vmatpush1.bf16.msra.mxu0 0
    %275 = vmatprep.subr.bf16.mxu0 0
    %276 = vmatpush1.bf16.msra.mxu0 0
    %277 = vmatprep.subr.bf16.mxu0 0
    %278 = vmatpush1.bf16.msra.mxu0 0
    %279 = vmatprep.subr.bf16.mxu0 0
    %280 = vmatpush1.bf16.msra.mxu0 0
    %281 = vmatprep.subr.bf16.mxu0 0
    %282 = vmatpush1.bf16.msra.mxu0 0
    %283 = vmatprep.subr.bf16.mxu0 0
    %284 = vmatpush1.bf16.msra.mxu0 0
    %285 = vmatprep.subr.bf16.mxu0 0
    %286 = vmatpush1.bf16.msra.mxu0 0
    %287 = vmatprep.subr.bf16.mxu0 0
    %288 = vmatpush1.bf16.msra.mxu0 0
    %289 = vmatprep.subr.bf16.mxu0 0
    %290 = vmatpush1.bf16.msra.mxu0 0
    %291 = vmatprep.subr.bf16.mxu0 0
    %292 = vmatpush1.bf16.msra.mxu0 0
    %293 = vmatprep.mubr.bf16.mxu0 0
    %294 = vmatmul.mubr.bf16.gmra.mrb[0].mxu0 %v218
    %v295 = vpop.f32.mrb[0].mxu0
    %v296 = vadd.f32 0.0, %v295
    %v297 = vpop.f32.mrb[0].mxu0
    %v298 = vadd.f32 0.0, %v297
    %v299 = vpop.f32.mrb[0].mxu0
    %v300 = vpop.f32.mrb[0].mxu0
    %301 = vdwg.mxu0
    %302 = vmatprep.subr.bf16.mxu0 %v189
    %303 = vmatpush1.bf16.msra.mxu0 %v188
    %304 = vmatprep.subr.bf16.mxu0 %v197
    %305 = vmatpush1.bf16.msra.mxu0 %v196
    %306 = vmatprep.subr.bf16.mxu0 0
    %307 = vmatpush1.bf16.msra.mxu0 0
    %308 = vmatprep.subr.bf16.mxu0 0
    %309 = vmatpush1.bf16.msra.mxu0 0
    %310 = vmatprep.subr.bf16.mxu0 0
    %311 = vmatpush1.bf16.msra.mxu0 0
    %312 = vmatprep.subr.bf16.mxu0 0
    %313 = vmatpush1.bf16.msra.mxu0 0
    %314 = vmatprep.subr.bf16.mxu0 0
    %315 = vmatpush1.bf16.msra.mxu0 0
    %316 = vmatprep.subr.bf16.mxu0 0
    %317 = vmatpush1.bf16.msra.mxu0 0
    %318 = vmatprep.subr.bf16.mxu0 0
    %319 = vmatpush1.bf16.msra.mxu0 0
    %320 = vmatprep.subr.bf16.mxu0 0
    %321 = vmatpush1.bf16.msra.mxu0 0
    %322 = vmatprep.subr.bf16.mxu0 0
    %323 = vmatpush1.bf16.msra.mxu0 0
    %324 = vmatprep.subr.bf16.mxu0 0
    %325 = vmatpush1.bf16.msra.mxu0 0
    %326 = vmatprep.subr.bf16.mxu0 0
    %327 = vmatpush1.bf16.msra.mxu0 0
    %328 = vmatprep.subr.bf16.mxu0 0
    %329 = vmatpush1.bf16.msra.mxu0 0
    %330 = vmatprep.subr.bf16.mxu0 0
    %331 = vmatpush1.bf16.msra.mxu0 0
    %332 = vmatprep.subr.bf16.mxu0 0
    %333 = vmatpush1.bf16.msra.mxu0 0
    %334 = vmatprep.mubr.bf16.mxu0 0
    %335 = vmatmul.mubr.bf16.gmra.mrb[0].mxu0 %v218
    %v336 = vpop.f32.mrb[0].mxu0
    %v337 = vadd.f32 0.0, %v336
    %v338 = vpop.f32.mrb[0].mxu0
    %v339 = vadd.f32 0.0, %v338
    %v340 = vpop.f32.mrb[0].mxu0
    %v341 = vpop.f32.mrb[0].mxu0
    %342 = vdwg.mxu0
    %343 = vmatprep.subr.bf16.mxu0 %v191
    %344 = vmatpush1.bf16.msra.mxu0 %v190
    %345 = vmatprep.subr.bf16.mxu0 %v199
    %346 = vmatpush1.bf16.msra.mxu0 %v198
    %347 = vmatprep.subr.bf16.mxu0 0
    %348 = vmatpush1.bf16.msra.mxu0 0
    %349 = vmatprep.subr.bf16.mxu0 0
    %350 = vmatpush1.bf16.msra.mxu0 0
    %351 = vmatprep.subr.bf16.mxu0 0
    %352 = vmatpush1.bf16.msra.mxu0 0
    %353 = vmatprep.subr.bf16.mxu0 0
    %354 = vmatpush1.bf16.msra.mxu0 0
    %355 = vmatprep.subr.bf16.mxu0 0
    %356 = vmatpush1.bf16.msra.mxu0 0
    %357 = vmatprep.subr.bf16.mxu0 0
    %358 = vmatpush1.bf16.msra.mxu0 0
    %359 = vmatprep.subr.bf16.mxu0 0
    %360 = vmatpush1.bf16.msra.mxu0 0
    %361 = vmatprep.subr.bf16.mxu0 0
    %362 = vmatpush1.bf16.msra.mxu0 0
    %363 = vmatprep.subr.bf16.mxu0 0
    %364 = vmatpush1.bf16.msra.mxu0 0
    %365 = vmatprep.subr.bf16.mxu0 0
    %366 = vmatpush1.bf16.msra.mxu0 0
    %367 = vmatprep.subr.bf16.mxu0 0
    %368 = vmatpush1.bf16.msra.mxu0 0
    %369 = vmatprep.subr.bf16.mxu0 0
    %370 = vmatpush1.bf16.msra.mxu0 0
    %371 = vmatprep.subr.bf16.mxu0 0
    %372 = vmatpush1.bf16.msra.mxu0 0
    %373 = vmatprep.subr.bf16.mxu0 0
    %374 = vmatpush1.bf16.msra.mxu0 0
    %375 = vmatprep.mubr.bf16.mxu0 0
    %376 = vmatmul.mubr.bf16.gmra.mrb[0].mxu0 %v218
    %v377 = vpop.f32.mrb[0].mxu0
    %v378 = vadd.f32 0.0, %v377
    %v379 = vpop.f32.mrb[0].mxu0
    %v380 = vadd.f32 0.0, %v379
    %v381 = vpop.f32.mrb[0].mxu0
    %v382 = vpop.f32.mrb[0].mxu0
    %383 = vdwg.mxu0
    %v384 = vrot.slane %v255, 4
    %v385 = vadd.f32 %v255, %v384
    %v386 = vrot.slane %v385, 2
    %v387 = vadd.f32 %v385, %v386
    %v388 = vrot.slane %v387, 1
    %v389 = vadd.f32 %v387, %v388
    %v390 = vrot.slane %v257, 4
    %v391 = vadd.f32 %v257, %v390
    %v392 = vrot.slane %v391, 2
    %v393 = vadd.f32 %v391, %v392
    %v394 = vrot.slane %v393, 1
    %v395 = vadd.f32 %v393, %v394
    %v396 = vrot.slane %v296, 4
    %v397 = vadd.f32 %v296, %v396
    %v398 = vrot.slane %v397, 2
    %v399 = vadd.f32 %v397, %v398
    %v400 = vrot.slane %v399, 1
    %v401 = vadd.f32 %v399, %v400
    %v402 = vrot.slane %v298, 4
    %v403 = vadd.f32 %v298, %v402
    %v404 = vrot.slane %v403, 2
    %v405 = vadd.f32 %v403, %v404
    %v406 = vrot.slane %v405, 1
    %v407 = vadd.f32 %v405, %v406
    %v408 = vrot.slane %v337, 4
    %v409 = vadd.f32 %v337, %v408
    %v410 = vrot.slane %v409, 2
    %v411 = vadd.f32 %v409, %v410
    %v412 = vrot.slane %v411, 1
    %v413 = vadd.f32 %v411, %v412
    %v414 = vrot.slane %v339, 4
    %v415 = vadd.f32 %v339, %v414
    %v416 = vrot.slane %v415, 2
    %v417 = vadd.f32 %v415, %v416
    %v418 = vrot.slane %v417, 1
    %v419 = vadd.f32 %v417, %v418
    %v420 = vrot.slane %v378, 4
    %v421 = vadd.f32 %v378, %v420
    %v422 = vrot.slane %v421, 2
    %v423 = vadd.f32 %v421, %v422
    %v424 = vrot.slane %v423, 1
    %v425 = vadd.f32 %v423, %v424
    %v426 = vrot.slane %v380, 4
    %v427 = vadd.f32 %v380, %v426
    %v428 = vrot.slane %v427, 2
    %v429 = vadd.f32 %v427, %v428
    %v430 = vrot.slane %v429, 1
    %v431 = vadd.f32 %v429, %v430
    %v432 = vrcp.pop 8.0
    %v433 = vmul.f32 %v389, %v432
    %v434 = vmul.f32 %v395, %v432
    %v435 = vmul.f32 %v401, %v432
    %v436 = vmul.f32 %v407, %v432
    %v437 = vmul.f32 %v413, %v432
    %v438 = vmul.f32 %v419, %v432
    %v439 = vmul.f32 %v425, %v432
    %v440 = vmul.f32 %v431, %v432
    %v441 = vmul.f32 %v255, %v255
    %v442 = vmul.f32 %v257, %v257
    %v443 = vmul.f32 %v296, %v296
    %v444 = vmul.f32 %v298, %v298
    %v445 = vmul.f32 %v337, %v337
    %v446 = vmul.f32 %v339, %v339
    %v447 = vmul.f32 %v378, %v378
    %v448 = vmul.f32 %v380, %v380
    %v449 = vrot.slane %v441, 4
    %v450 = vadd.f32 %v441, %v449
    %v451 = vrot.slane %v450, 2
    %v452 = vadd.f32 %v450, %v451
    %v453 = vrot.slane %v452, 1
    %v454 = vadd.f32 %v452, %v453
    %v455 = vrot.slane %v442, 4
    %v456 = vadd.f32 %v442, %v455
    %v457 = vrot.slane %v456, 2
    %v458 = vadd.f32 %v456, %v457
    %v459 = vrot.slane %v458, 1
    %v460 = vadd.f32 %v458, %v459
    %v461 = vrot.slane %v443, 4
    %v462 = vadd.f32 %v443, %v461
    %v463 = vrot.slane %v462, 2
    %v464 = vadd.f32 %v462, %v463
    %v465 = vrot.slane %v464, 1
    %v466 = vadd.f32 %v464, %v465
    %v467 = vrot.slane %v444, 4
    %v468 = vadd.f32 %v444, %v467
    %v469 = vrot.slane %v468, 2
    %v470 = vadd.f32 %v468, %v469
    %v471 = vrot.slane %v470, 1
    %v472 = vadd.f32 %v470, %v471
    %v473 = vrot.slane %v445, 4
    %v474 = vadd.f32 %v445, %v473
    %v475 = vrot.slane %v474, 2
    %v476 = vadd.f32 %v474, %v475
    %v477 = vrot.slane %v476, 1
    %v478 = vadd.f32 %v476, %v477
    %v479 = vrot.slane %v446, 4
    %v480 = vadd.f32 %v446, %v479
    %v481 = vrot.slane %v480, 2
    %v482 = vadd.f32 %v480, %v481
    %v483 = vrot.slane %v482, 1
    %v484 = vadd.f32 %v482, %v483
    %v485 = vrot.slane %v447, 4
    %v486 = vadd.f32 %v447, %v485
    %v487 = vrot.slane %v486, 2
    %v488 = vadd.f32 %v486, %v487
    %v489 = vrot.slane %v488, 1
    %v490 = vadd.f32 %v488, %v489
    %v491 = vrot.slane %v448, 4
    %v492 = vadd.f32 %v448, %v491
    %v493 = vrot.slane %v492, 2
    %v494 = vadd.f32 %v492, %v493
    %v495 = vrot.slane %v494, 1
    %v496 = vadd.f32 %v494, %v495
    %v497 = vmul.f32 %v454, %v432
    %v498 = vmul.f32 %v460, %v432
    %v499 = vmul.f32 %v466, %v432
    %v500 = vmul.f32 %v472, %v432
    %v501 = vmul.f32 %v478, %v432
    %v502 = vmul.f32 %v484, %v432
    %v503 = vmul.f32 %v490, %v432
    %v504 = vmul.f32 %v496, %v432
    %v505 = vmul.f32 %v433, %v433
    %v506 = vmul.f32 %v434, %v434
    %v507 = vmul.f32 %v435, %v435
    %v508 = vmul.f32 %v436, %v436
    %v509 = vmul.f32 %v437, %v437
    %v510 = vmul.f32 %v438, %v438
    %v511 = vmul.f32 %v439, %v439
    %v512 = vmul.f32 %v440, %v440
    %v513 = vsub.f32 %v497, %v505
    %v514 = vsub.f32 %v498, %v506
    %v515 = vsub.f32 %v499, %v507
    %v516 = vsub.f32 %v500, %v508
    %v517 = vsub.f32 %v501, %v509
    %v518 = vsub.f32 %v502, %v510
    %v519 = vsub.f32 %v503, %v511
    %v520 = vsub.f32 %v504, %v512
    %v521 = vsub.f32 %v255, %v433
    %v522 = vsub.f32 %v257, %v434
    %v523 = vsub.f32 %v296, %v435
    %v524 = vsub.f32 %v298, %v436
    %v525 = vsub.f32 %v337, %v437
    %v526 = vsub.f32 %v339, %v438
    %v527 = vsub.f32 %v378, %v439
    %v528 = vsub.f32 %v380, %v440
    %v529 = vadd.f32 %v513, 1e-05
    %v530 = vadd.f32 %v514, 1e-05
    %v531 = vadd.f32 %v515, 1e-05
    %v532 = vadd.f32 %v516, 1e-05
    %v533 = vadd.f32 %v517, 1e-05
    %v534 = vadd.f32 %v518, 1e-05
    %v535 = vadd.f32 %v519, 1e-05
    %v536 = vadd.f32 %v520, 1e-05
    %v537 = vrsqrt.pop %v529
    %v538 = vrsqrt.pop %v530
    %v539 = vrsqrt.pop %v531
    %v540 = vrsqrt.pop %v532
    %v541 = vrsqrt.pop %v533
    %v542 = vrsqrt.pop %v534
    %v543 = vrsqrt.pop %v535
    %v544 = vrsqrt.pop %v536
    %v546 = vlaneseq
    %v547 = vshrl.u32 %v546, 7
    %v548 = vsub.s32 0, %v547
    %v549 = vrot.slane %v106, %v548
    %v550 = vlaneseq
    %v551 = vshrl.u32 %v550, 7
    %v552 = vsub.s32 1, %v551
    %v553 = vrot.slane %v106, %v552
    %v554 = vlaneseq
    %v555 = vshrl.u32 %v554, 7
    %v556 = vsub.s32 2, %v555
    %v557 = vrot.slane %v106, %v556
    %v558 = vlaneseq
    %v559 = vshrl.u32 %v558, 7
    %v560 = vsub.s32 3, %v559
    %v561 = vrot.slane %v106, %v560
    %v562 = vlaneseq
    %v563 = vshrl.u32 %v562, 7
    %v564 = vsub.s32 4, %v563
    %v565 = vrot.slane %v106, %v564
    %v566 = vlaneseq
    %v567 = vshrl.u32 %v566, 7
    %v568 = vsub.s32 5, %v567
    %v569 = vrot.slane %v106, %v568
    %v570 = vlaneseq
    %v571 = vshrl.u32 %v570, 7
    %v572 = vsub.s32 6, %v571
    %v573 = vrot.slane %v106, %v572
    %v574 = vlaneseq
    %v575 = vshrl.u32 %v574, 7
    %v576 = vsub.s32 7, %v575
    %v577 = vrot.slane %v106, %v576
    %v586 = vmul.f32 %v537, %v549
    %v587 = vmul.f32 %v538, %v553
    %v588 = vmul.f32 %v539, %v557
    %v589 = vmul.f32 %v540, %v561
    %v590 = vmul.f32 %v541, %v565
    %v591 = vmul.f32 %v542, %v569
    %v592 = vmul.f32 %v543, %v573
    %v593 = vmul.f32 %v544, %v577
    %v594 = vlaneseq
    %v595 = vshrl.u32 %v594, 7
    %v596 = vsub.s32 0, %v595
    %v597 = vrot.slane %v586, %v596
    %v598 = vlaneseq
    %v599 = vshrl.u32 %v598, 7
    %v600 = vsub.s32 0, %v599
    %v601 = vrot.slane %v587, %v600
    %v602 = vlaneseq
    %v603 = vshrl.u32 %v602, 7
    %v604 = vsub.s32 0, %v603
    %v605 = vrot.slane %v588, %v604
    %v606 = vlaneseq
    %v607 = vshrl.u32 %v606, 7
    %v608 = vsub.s32 0, %v607
    %v609 = vrot.slane %v589, %v608
    %v610 = vlaneseq
    %v611 = vshrl.u32 %v610, 7
    %v612 = vsub.s32 0, %v611
    %v613 = vrot.slane %v590, %v612
    %v614 = vlaneseq
    %v615 = vshrl.u32 %v614, 7
    %v616 = vsub.s32 0, %v615
    %v617 = vrot.slane %v591, %v616
    %v618 = vlaneseq
    %v619 = vshrl.u32 %v618, 7
    %v620 = vsub.s32 0, %v619
    %v621 = vrot.slane %v592, %v620
    %v622 = vlaneseq
    %v623 = vshrl.u32 %v622, 7
    %v624 = vsub.s32 0, %v623
    %v625 = vrot.slane %v593, %v624
    %v626 = vmul.f32 %v521, %v597
    %v627 = vmul.f32 %v522, %v601
    %v628 = vmul.f32 %v523, %v605
    %v629 = vmul.f32 %v524, %v609
    %v630 = vmul.f32 %v525, %v613
    %v631 = vmul.f32 %v526, %v617
    %v632 = vmul.f32 %v527, %v621
    %v633 = vmul.f32 %v528, %v625
    %v635 = vlaneseq
    %v636 = vshrl.u32 %v635, 7
    %v637 = vsub.s32 0, %v636
    %v638 = vrot.slane %v110, %v637
    %v639 = vlaneseq
    %v640 = vshrl.u32 %v639, 7
    %v641 = vsub.s32 1, %v640
    %v642 = vrot.slane %v110, %v641
    %v643 = vlaneseq
    %v644 = vshrl.u32 %v643, 7
    %v645 = vsub.s32 2, %v644
    %v646 = vrot.slane %v110, %v645
    %v647 = vlaneseq
    %v648 = vshrl.u32 %v647, 7
    %v649 = vsub.s32 3, %v648
    %v650 = vrot.slane %v110, %v649
    %v651 = vlaneseq
    %v652 = vshrl.u32 %v651, 7
    %v653 = vsub.s32 4, %v652
    %v654 = vrot.slane %v110, %v653
    %v655 = vlaneseq
    %v656 = vshrl.u32 %v655, 7
    %v657 = vsub.s32 5, %v656
    %v658 = vrot.slane %v110, %v657
    %v659 = vlaneseq
    %v660 = vshrl.u32 %v659, 7
    %v661 = vsub.s32 6, %v660
    %v662 = vrot.slane %v110, %v661
    %v663 = vlaneseq
    %v664 = vshrl.u32 %v663, 7
    %v665 = vsub.s32 7, %v664
    %v666 = vrot.slane %v110, %v665
    %v675 = vadd.f32 %v626, %v638
    %v676 = vadd.f32 %v627, %v642
    %v677 = vadd.f32 %v628, %v646
    %v678 = vadd.f32 %v629, %v650
    %v679 = vadd.f32 %v630, %v654
    %v680 = vadd.f32 %v631, %v658
    %v681 = vadd.f32 %v632, %v662
    %v682 = vadd.f32 %v633, %v666
    %v683 = vmax.f32 %v675, 0.0
    %v684 = vmax.f32 %v676, 0.0
    %v685 = vmax.f32 %v677, 0.0
    %v686 = vmax.f32 %v678, 0.0
    %v687 = vmax.f32 %v679, 0.0
    %v688 = vmax.f32 %v680, 0.0
    %v689 = vmax.f32 %v681, 0.0
    %v690 = vmax.f32 %v682, 0.0
    %s691 = smul.u32 4, 128
    %s692 = smul.u32 %s691, 8
    %s693 = sshll.u32 %s692, 4
    %694 = dma.done [#allocation4], %s693
    %v695 = vpack.c.bf16 %v683, %v683
    %v696 = vpack.c.bf16 %v684, %v684
    %v697 = vpack.c.bf16 %v685, %v685
    %v698 = vpack.c.bf16 %v686, %v686
    %v699 = vpack.c.bf16 %v687, %v687
    %v700 = vpack.c.bf16 %v688, %v688
    %v701 = vpack.c.bf16 %v689, %v689
    %v702 = vpack.c.bf16 %v690, %v690
    %v703 = vld [vmem:[#allocation2] sm:$0xff]
    %v704 = vld [vmem:[#allocation2 + $0x8] sm:$0xff]
    %v705 = vld [vmem:[#allocation2 + $0x10] sm:$0xff]
    %v706 = vld [vmem:[#allocation2 + $0x18] sm:$0xff]
    %v707 = vld [vmem:[#allocation2 + $0x20] sm:$0xff]
    %v708 = vld [vmem:[#allocation2 + $0x28] sm:$0xff]
    %v709 = vld [vmem:[#allocation2 + $0x30] sm:$0xff]
    %v710 = vld [vmem:[#allocation2 + $0x38] sm:$0xff]
    %v711 = vld [vmem:[#allocation2 + $0x40] sm:$0xff]
    %v712 = vld [vmem:[#allocation2 + $0x48] sm:$0xff]
    %v713 = vld [vmem:[#allocation2 + $0x50] sm:$0xff]
    %v714 = vld [vmem:[#allocation2 + $0x58] sm:$0xff]
    %v715 = vld [vmem:[#allocation2 + $0x60] sm:$0xff]
    %v716 = vld [vmem:[#allocation2 + $0x68] sm:$0xff]
    %v717 = vld [vmem:[#allocation2 + $0x70] sm:$0xff]
    %v718 = vld [vmem:[#allocation2 + $0x78] sm:$0xff]
    %v719 = vld [vmem:[#allocation2 + $0x80] sm:$0xff]
    %v720 = vld [vmem:[#allocation2 + $0x88] sm:$0xff]
    %v721 = vld [vmem:[#allocation2 + $0x90] sm:$0xff]
    %v722 = vld [vmem:[#allocation2 + $0x98] sm:$0xff]
    %v723 = vld [vmem:[#allocation2 + $0xa0] sm:$0xff]
    %v724 = vld [vmem:[#allocation2 + $0xa8] sm:$0xff]
    %v725 = vld [vmem:[#allocation2 + $0xb0] sm:$0xff]
    %v726 = vld [vmem:[#allocation2 + $0xb8] sm:$0xff]
    %v727 = vld [vmem:[#allocation2 + $0xc0] sm:$0xff]
    %v728 = vld [vmem:[#allocation2 + $0xc8] sm:$0xff]
    %v729 = vld [vmem:[#allocation2 + $0xd0] sm:$0xff]
    %v730 = vld [vmem:[#allocation2 + $0xd8] sm:$0xff]
    %v731 = vld [vmem:[#allocation2 + $0xe0] sm:$0xff]
    %v732 = vld [vmem:[#allocation2 + $0xe8] sm:$0xff]
    %v733 = vld [vmem:[#allocation2 + $0xf0] sm:$0xff]
    %v734 = vld [vmem:[#allocation2 + $0xf8] sm:$0xff]
    %v735 = vld [vmem:[#allocation2 + $0x100] sm:$0xff]
    %v736 = vld [vmem:[#allocation2 + $0x108] sm:$0xff]
    %v737 = vld [vmem:[#allocation2 + $0x110] sm:$0xff]
    %v738 = vld [vmem:[#allocation2 + $0x118] sm:$0xff]
    %v739 = vld [vmem:[#allocation2 + $0x120] sm:$0xff]
    %v740 = vld [vmem:[#allocation2 + $0x128] sm:$0xff]
    %v741 = vld [vmem:[#allocation2 + $0x130] sm:$0xff]
    %v742 = vld [vmem:[#allocation2 + $0x138] sm:$0xff]
    %v743 = vld [vmem:[#allocation2 + $0x140] sm:$0xff]
    %v744 = vld [vmem:[#allocation2 + $0x148] sm:$0xff]
    %v745 = vld [vmem:[#allocation2 + $0x150] sm:$0xff]
    %v746 = vld [vmem:[#allocation2 + $0x158] sm:$0xff]
    %v747 = vld [vmem:[#allocation2 + $0x160] sm:$0xff]
    %v748 = vld [vmem:[#allocation2 + $0x168] sm:$0xff]
    %v749 = vld [vmem:[#allocation2 + $0x170] sm:$0xff]
    %v750 = vld [vmem:[#allocation2 + $0x178] sm:$0xff]
    %v751 = vld [vmem:[#allocation2 + $0x180] sm:$0xff]
    %v752 = vld [vmem:[#allocation2 + $0x188] sm:$0xff]
    %v753 = vld [vmem:[#allocation2 + $0x190] sm:$0xff]
    %v754 = vld [vmem:[#allocation2 + $0x198] sm:$0xff]
    %v755 = vld [vmem:[#allocation2 + $0x1a0] sm:$0xff]
    %v756 = vld [vmem:[#allocation2 + $0x1a8] sm:$0xff]
    %v757 = vld [vmem:[#allocation2 + $0x1b0] sm:$0xff]
    %v758 = vld [vmem:[#allocation2 + $0x1b8] sm:$0xff]
    %v759 = vld [vmem:[#allocation2 + $0x1c0] sm:$0xff]
    %v760 = vld [vmem:[#allocation2 + $0x1c8] sm:$0xff]
    %v761 = vld [vmem:[#allocation2 + $0x1d0] sm:$0xff]
    %v762 = vld [vmem:[#allocation2 + $0x1d8] sm:$0xff]
    %v763 = vld [vmem:[#allocation2 + $0x1e0] sm:$0xff]
    %v764 = vld [vmem:[#allocation2 + $0x1e8] sm:$0xff]
    %v765 = vld [vmem:[#allocation2 + $0x1f0] sm:$0xff]
    %v766 = vld [vmem:[#allocation2 + $0x1f8] sm:$0xff]
    %v767 = vld [vmem:[#allocation2 + $0x200] sm:$0xff]
    %v768 = vld [vmem:[#allocation2 + $0x208] sm:$0xff]
    %v769 = vld [vmem:[#allocation2 + $0x210] sm:$0xff]
    %v770 = vld [vmem:[#allocation2 + $0x218] sm:$0xff]
    %v771 = vld [vmem:[#allocation2 + $0x220] sm:$0xff]
    %v772 = vld [vmem:[#allocation2 + $0x228] sm:$0xff]
    %v773 = vld [vmem:[#allocation2 + $0x230] sm:$0xff]
    %v774 = vld [vmem:[#allocation2 + $0x238] sm:$0xff]
    %v775 = vld [vmem:[#allocation2 + $0x240] sm:$0xff]
    %v776 = vld [vmem:[#allocation2 + $0x248] sm:$0xff]
    %v777 = vld [vmem:[#allocation2 + $0x250] sm:$0xff]
    %v778 = vld [vmem:[#allocation2 + $0x258] sm:$0xff]
    %v779 = vld [vmem:[#allocation2 + $0x260] sm:$0xff]
    %v780 = vld [vmem:[#allocation2 + $0x268] sm:$0xff]
    %v781 = vld [vmem:[#allocation2 + $0x270] sm:$0xff]
    %v782 = vld [vmem:[#allocation2 + $0x278] sm:$0xff]
    %v783 = vld [vmem:[#allocation2 + $0x280] sm:$0xff]
    %v784 = vld [vmem:[#allocation2 + $0x288] sm:$0xff]
    %v785 = vld [vmem:[#allocation2 + $0x290] sm:$0xff]
    %v786 = vld [vmem:[#allocation2 + $0x298] sm:$0xff]
    %v787 = vld [vmem:[#allocation2 + $0x2a0] sm:$0xff]
    %v788 = vld [vmem:[#allocation2 + $0x2a8] sm:$0xff]
    %v789 = vld [vmem:[#allocation2 + $0x2b0] sm:$0xff]
    %v790 = vld [vmem:[#allocation2 + $0x2b8] sm:$0xff]
    %v791 = vld [vmem:[#allocation2 + $0x2c0] sm:$0xff]
    %v792 = vld [vmem:[#allocation2 + $0x2c8] sm:$0xff]
    %v793 = vld [vmem:[#allocation2 + $0x2d0] sm:$0xff]
    %v794 = vld [vmem:[#allocation2 + $0x2d8] sm:$0xff]
    %v795 = vld [vmem:[#allocation2 + $0x2e0] sm:$0xff]
    %v796 = vld [vmem:[#allocation2 + $0x2e8] sm:$0xff]
    %v797 = vld [vmem:[#allocation2 + $0x2f0] sm:$0xff]
    %v798 = vld [vmem:[#allocation2 + $0x2f8] sm:$0xff]
    %v799 = vld [vmem:[#allocation2 + $0x300] sm:$0xff]
    %v800 = vld [vmem:[#allocation2 + $0x308] sm:$0xff]
    %v801 = vld [vmem:[#allocation2 + $0x310] sm:$0xff]
    %v802 = vld [vmem:[#allocation2 + $0x318] sm:$0xff]
    %v803 = vld [vmem:[#allocation2 + $0x320] sm:$0xff]
    %v804 = vld [vmem:[#allocation2 + $0x328] sm:$0xff]
    %v805 = vld [vmem:[#allocation2 + $0x330] sm:$0xff]
    %v806 = vld [vmem:[#allocation2 + $0x338] sm:$0xff]
    %v807 = vld [vmem:[#allocation2 + $0x340] sm:$0xff]
    %v808 = vld [vmem:[#allocation2 + $0x348] sm:$0xff]
    %v809 = vld [vmem:[#allocation2 + $0x350] sm:$0xff]
    %v810 = vld [vmem:[#allocation2 + $0x358] sm:$0xff]
    %v811 = vld [vmem:[#allocation2 + $0x360] sm:$0xff]
    %v812 = vld [vmem:[#allocation2 + $0x368] sm:$0xff]
    %v813 = vld [vmem:[#allocation2 + $0x370] sm:$0xff]
    %v814 = vld [vmem:[#allocation2 + $0x378] sm:$0xff]
    %v815 = vld [vmem:[#allocation2 + $0x380] sm:$0xff]
    %v816 = vld [vmem:[#allocation2 + $0x388] sm:$0xff]
    %v817 = vld [vmem:[#allocation2 + $0x390] sm:$0xff]
    %v818 = vld [vmem:[#allocation2 + $0x398] sm:$0xff]
    %v819 = vld [vmem:[#allocation2 + $0x3a0] sm:$0xff]
    %v820 = vld [vmem:[#allocation2 + $0x3a8] sm:$0xff]
    %v821 = vld [vmem:[#allocation2 + $0x3b0] sm:$0xff]
    %v822 = vld [vmem:[#allocation2 + $0x3b8] sm:$0xff]
    %v823 = vld [vmem:[#allocation2 + $0x3c0] sm:$0xff]
    %v824 = vld [vmem:[#allocation2 + $0x3c8] sm:$0xff]
    %v825 = vld [vmem:[#allocation2 + $0x3d0] sm:$0xff]
    %v826 = vld [vmem:[#allocation2 + $0x3d8] sm:$0xff]
    %v827 = vld [vmem:[#allocation2 + $0x3e0] sm:$0xff]
    %v828 = vld [vmem:[#allocation2 + $0x3e8] sm:$0xff]
    %v829 = vld [vmem:[#allocation2 + $0x3f0] sm:$0xff]
    %v830 = vld [vmem:[#allocation2 + $0x3f8] sm:$0xff]
    %v831 = vld [vmem:[#allocation2 + $0x400] sm:$0xff]
    %v832 = vld [vmem:[#allocation2 + $0x408] sm:$0xff]
    %v833 = vld [vmem:[#allocation2 + $0x410] sm:$0xff]
    %v834 = vld [vmem:[#allocation2 + $0x418] sm:$0xff]
    %v835 = vld [vmem:[#allocation2 + $0x420] sm:$0xff]
    %v836 = vld [vmem:[#allocation2 + $0x428] sm:$0xff]
    %v837 = vld [vmem:[#allocation2 + $0x430] sm:$0xff]
    %v838 = vld [vmem:[#allocation2 + $0x438] sm:$0xff]
    %v839 = vld [vmem:[#allocation2 + $0x440] sm:$0xff]
    %v840 = vld [vmem:[#allocation2 + $0x448] sm:$0xff]
    %v841 = vld [vmem:[#allocation2 + $0x450] sm:$0xff]
    %v842 = vld [vmem:[#allocation2 + $0x458] sm:$0xff]
    %v843 = vld [vmem:[#allocation2 + $0x460] sm:$0xff]
    %v844 = vld [vmem:[#allocation2 + $0x468] sm:$0xff]
    %v845 = vld [vmem:[#allocation2 + $0x470] sm:$0xff]
    %v846 = vld [vmem:[#allocation2 + $0x478] sm:$0xff]
    %v847 = vld [vmem:[#allocation2 + $0x480] sm:$0xff]
    %v848 = vld [vmem:[#allocation2 + $0x488] sm:$0xff]
    %v849 = vld [vmem:[#allocation2 + $0x490] sm:$0xff]
    %v850 = vld [vmem:[#allocation2 + $0x498] sm:$0xff]
    %v851 = vld [vmem:[#allocation2 + $0x4a0] sm:$0xff]
    %v852 = vld [vmem:[#allocation2 + $0x4a8] sm:$0xff]
    %v853 = vld [vmem:[#allocation2 + $0x4b0] sm:$0xff]
    %v854 = vld [vmem:[#allocation2 + $0x4b8] sm:$0xff]
    %v855 = vld [vmem:[#allocation2 + $0x4c0] sm:$0xff]
    %v856 = vld [vmem:[#allocation2 + $0x4c8] sm:$0xff]
    %v857 = vld [vmem:[#allocation2 + $0x4d0] sm:$0xff]
    %v858 = vld [vmem:[#allocation2 + $0x4d8] sm:$0xff]
    %v859 = vld [vmem:[#allocation2 + $0x4e0] sm:$0xff]
    %v860 = vld [vmem:[#allocation2 + $0x4e8] sm:$0xff]
    %v861 = vld [vmem:[#allocation2 + $0x4f0] sm:$0xff]
    %v862 = vld [vmem:[#allocation2 + $0x4f8] sm:$0xff]
    %v863 = vld [vmem:[#allocation2 + $0x500] sm:$0xff]
    %v864 = vld [vmem:[#allocation2 + $0x508] sm:$0xff]
    %v865 = vld [vmem:[#allocation2 + $0x510] sm:$0xff]
    %v866 = vld [vmem:[#allocation2 + $0x518] sm:$0xff]
    %v867 = vld [vmem:[#allocation2 + $0x520] sm:$0xff]
    %v868 = vld [vmem:[#allocation2 + $0x528] sm:$0xff]
    %v869 = vld [vmem:[#allocation2 + $0x530] sm:$0xff]
    %v870 = vld [vmem:[#allocation2 + $0x538] sm:$0xff]
    %v871 = vld [vmem:[#allocation2 + $0x540] sm:$0xff]
    %v872 = vld [vmem:[#allocation2 + $0x548] sm:$0xff]
    %v873 = vld [vmem:[#allocation2 + $0x550] sm:$0xff]
    %v874 = vld [vmem:[#allocation2 + $0x558] sm:$0xff]
    %v875 = vld [vmem:[#allocation2 + $0x560] sm:$0xff]
    %v876 = vld [vmem:[#allocation2 + $0x568] sm:$0xff]
    %v877 = vld [vmem:[#allocation2 + $0x570] sm:$0xff]
    %v878 = vld [vmem:[#allocation2 + $0x578] sm:$0xff]
    %v879 = vld [vmem:[#allocation2 + $0x580] sm:$0xff]
    %v880 = vld [vmem:[#allocation2 + $0x588] sm:$0xff]
    %v881 = vld [vmem:[#allocation2 + $0x590] sm:$0xff]
    %v882 = vld [vmem:[#allocation2 + $0x598] sm:$0xff]
    %v883 = vld [vmem:[#allocation2 + $0x5a0] sm:$0xff]
    %v884 = vld [vmem:[#allocation2 + $0x5a8] sm:$0xff]
    %v885 = vld [vmem:[#allocation2 + $0x5b0] sm:$0xff]
    %v886 = vld [vmem:[#allocation2 + $0x5b8] sm:$0xff]
    %v887 = vld [vmem:[#allocation2 + $0x5c0] sm:$0xff]
    %v888 = vld [vmem:[#allocation2 + $0x5c8] sm:$0xff]
    %v889 = vld [vmem:[#allocation2 + $0x5d0] sm:$0xff]
    %v890 = vld [vmem:[#allocation2 + $0x5d8] sm:$0xff]
    %v891 = vld [vmem:[#allocation2 + $0x5e0] sm:$0xff]
    %v892 = vld [vmem:[#allocation2 + $0x5e8] sm:$0xff]
    %v893 = vld [vmem:[#allocation2 + $0x5f0] sm:$0xff]
    %v894 = vld [vmem:[#allocation2 + $0x5f8] sm:$0xff]
    %v895 = vld [vmem:[#allocation2 + $0x600] sm:$0xff]
    %v896 = vld [vmem:[#allocation2 + $0x608] sm:$0xff]
    %v897 = vld [vmem:[#allocation2 + $0x610] sm:$0xff]
    %v898 = vld [vmem:[#allocation2 + $0x618] sm:$0xff]
    %v899 = vld [vmem:[#allocation2 + $0x620] sm:$0xff]
    %v900 = vld [vmem:[#allocation2 + $0x628] sm:$0xff]
    %v901 = vld [vmem:[#allocation2 + $0x630] sm:$0xff]
    %v902 = vld [vmem:[#allocation2 + $0x638] sm:$0xff]
    %v903 = vld [vmem:[#allocation2 + $0x640] sm:$0xff]
    %v904 = vld [vmem:[#allocation2 + $0x648] sm:$0xff]
    %v905 = vld [vmem:[#allocation2 + $0x650] sm:$0xff]
    %v906 = vld [vmem:[#allocation2 + $0x658] sm:$0xff]
    %v907 = vld [vmem:[#allocation2 + $0x660] sm:$0xff]
    %v908 = vld [vmem:[#allocation2 + $0x668] sm:$0xff]
    %v909 = vld [vmem:[#allocation2 + $0x670] sm:$0xff]
    %v910 = vld [vmem:[#allocation2 + $0x678] sm:$0xff]
    %v911 = vld [vmem:[#allocation2 + $0x680] sm:$0xff]
    %v912 = vld [vmem:[#allocation2 + $0x688] sm:$0xff]
    %v913 = vld [vmem:[#allocation2 + $0x690] sm:$0xff]
    %v914 = vld [vmem:[#allocation2 + $0x698] sm:$0xff]
    %v915 = vld [vmem:[#allocation2 + $0x6a0] sm:$0xff]
    %v916 = vld [vmem:[#allocation2 + $0x6a8] sm:$0xff]
    %v917 = vld [vmem:[#allocation2 + $0x6b0] sm:$0xff]
    %v918 = vld [vmem:[#allocation2 + $0x6b8] sm:$0xff]
    %v919 = vld [vmem:[#allocation2 + $0x6c0] sm:$0xff]
    %v920 = vld [vmem:[#allocation2 + $0x6c8] sm:$0xff]
    %v921 = vld [vmem:[#allocation2 + $0x6d0] sm:$0xff]
    %v922 = vld [vmem:[#allocation2 + $0x6d8] sm:$0xff]
    %v923 = vld [vmem:[#allocation2 + $0x6e0] sm:$0xff]
    %v924 = vld [vmem:[#allocation2 + $0x6e8] sm:$0xff]
    %v925 = vld [vmem:[#allocation2 + $0x6f0] sm:$0xff]
    %v926 = vld [vmem:[#allocation2 + $0x6f8] sm:$0xff]
    %v927 = vld [vmem:[#allocation2 + $0x700] sm:$0xff]
    %v928 = vld [vmem:[#allocation2 + $0x708] sm:$0xff]
    %v929 = vld [vmem:[#allocation2 + $0x710] sm:$0xff]
    %v930 = vld [vmem:[#allocation2 + $0x718] sm:$0xff]
    %v931 = vld [vmem:[#allocation2 + $0x720] sm:$0xff]
    %v932 = vld [vmem:[#allocation2 + $0x728] sm:$0xff]
    %v933 = vld [vmem:[#allocation2 + $0x730] sm:$0xff]
    %v934 = vld [vmem:[#allocation2 + $0x738] sm:$0xff]
    %v935 = vld [vmem:[#allocation2 + $0x740] sm:$0xff]
    %v936 = vld [vmem:[#allocation2 + $0x748] sm:$0xff]
    %v937 = vld [vmem:[#allocation2 + $0x750] sm:$0xff]
    %v938 = vld [vmem:[#allocation2 + $0x758] sm:$0xff]
    %v939 = vld [vmem:[#allocation2 + $0x760] sm:$0xff]
    %v940 = vld [vmem:[#allocation2 + $0x768] sm:$0xff]
    %v941 = vld [vmem:[#allocation2 + $0x770] sm:$0xff]
    %v942 = vld [vmem:[#allocation2 + $0x778] sm:$0xff]
    %v943 = vld [vmem:[#allocation2 + $0x780] sm:$0xff]
    %v944 = vld [vmem:[#allocation2 + $0x788] sm:$0xff]
    %v945 = vld [vmem:[#allocation2 + $0x790] sm:$0xff]
    %v946 = vld [vmem:[#allocation2 + $0x798] sm:$0xff]
    %v947 = vld [vmem:[#allocation2 + $0x7a0] sm:$0xff]
    %v948 = vld [vmem:[#allocation2 + $0x7a8] sm:$0xff]
    %v949 = vld [vmem:[#allocation2 + $0x7b0] sm:$0xff]
    %v950 = vld [vmem:[#allocation2 + $0x7b8] sm:$0xff]
    %v951 = vld [vmem:[#allocation2 + $0x7c0] sm:$0xff]
    %v952 = vld [vmem:[#allocation2 + $0x7c8] sm:$0xff]
    %v953 = vld [vmem:[#allocation2 + $0x7d0] sm:$0xff]
    %v954 = vld [vmem:[#allocation2 + $0x7d8] sm:$0xff]
    %v955 = vld [vmem:[#allocation2 + $0x7e0] sm:$0xff]
    %v956 = vld [vmem:[#allocation2 + $0x7e8] sm:$0xff]
    %v957 = vld [vmem:[#allocation2 + $0x7f0] sm:$0xff]
    %v958 = vld [vmem:[#allocation2 + $0x7f8] sm:$0xff]
    %v959 = vld [vmem:[#allocation2 + $0x800] sm:$0xff]
    %v960 = vld [vmem:[#allocation2 + $0x808] sm:$0xff]
    %v961 = vld [vmem:[#allocation2 + $0x810] sm:$0xff]
    %v962 = vld [vmem:[#allocation2 + $0x818] sm:$0xff]
    %v963 = vld [vmem:[#allocation2 + $0x820] sm:$0xff]
    %v964 = vld [vmem:[#allocation2 + $0x828] sm:$0xff]
    %v965 = vld [vmem:[#allocation2 + $0x830] sm:$0xff]
    %v966 = vld [vmem:[#allocation2 + $0x838] sm:$0xff]
    %v967 = vld [vmem:[#allocation2 + $0x840] sm:$0xff]
    %v968 = vld [vmem:[#allocation2 + $0x848] sm:$0xff]
    %v969 = vld [vmem:[#allocation2 + $0x850] sm:$0xff]
    %v970 = vld [vmem:[#allocation2 + $0x858] sm:$0xff]
    %v971 = vld [vmem:[#allocation2 + $0x860] sm:$0xff]
    %v972 = vld [vmem:[#allocation2 + $0x868] sm:$0xff]
    %v973 = vld [vmem:[#allocation2 + $0x870] sm:$0xff]
    %v974 = vld [vmem:[#allocation2 + $0x878] sm:$0xff]
    %v975 = vld [vmem:[#allocation2 + $0x880] sm:$0xff]
    %v976 = vld [vmem:[#allocation2 + $0x888] sm:$0xff]
    %v977 = vld [vmem:[#allocation2 + $0x890] sm:$0xff]
    %v978 = vld [vmem:[#allocation2 + $0x898] sm:$0xff]
    %v979 = vld [vmem:[#allocation2 + $0x8a0] sm:$0xff]
    %v980 = vld [vmem:[#allocation2 + $0x8a8] sm:$0xff]
    %v981 = vld [vmem:[#allocation2 + $0x8b0] sm:$0xff]
    %v982 = vld [vmem:[#allocation2 + $0x8b8] sm:$0xff]
    %v983 = vld [vmem:[#allocation2 + $0x8c0] sm:$0xff]
    %v984 = vld [vmem:[#allocation2 + $0x8c8] sm:$0xff]
    %v985 = vld [vmem:[#allocation2 + $0x8d0] sm:$0xff]
    %v986 = vld [vmem:[#allocation2 + $0x8d8] sm:$0xff]
    %v987 = vld [vmem:[#allocation2 + $0x8e0] sm:$0xff]
    %v988 = vld [vmem:[#allocation2 + $0x8e8] sm:$0xff]
    %v989 = vld [vmem:[#allocation2 + $0x8f0] sm:$0xff]
    %v990 = vld [vmem:[#allocation2 + $0x8f8] sm:$0xff]
    %v991 = vld [vmem:[#allocation2 + $0x900] sm:$0xff]
    %v992 = vld [vmem:[#allocation2 + $0x908] sm:$0xff]
    %v993 = vld [vmem:[#allocation2 + $0x910] sm:$0xff]
    %v994 = vld [vmem:[#allocation2 + $0x918] sm:$0xff]
    %v995 = vld [vmem:[#allocation2 + $0x920] sm:$0xff]
    %v996 = vld [vmem:[#allocation2 + $0x928] sm:$0xff]
    %v997 = vld [vmem:[#allocation2 + $0x930] sm:$0xff]
    %v998 = vld [vmem:[#allocation2 + $0x938] sm:$0xff]
    %v999 = vld [vmem:[#allocation2 + $0x940] sm:$0xff]
    %v1000 = vld [vmem:[#allocation2 + $0x948] sm:$0xff]
    %v1001 = vld [vmem:[#allocation2 + $0x950] sm:$0xff]
    %v1002 = vld [vmem:[#allocation2 + $0x958] sm:$0xff]
    %v1003 = vld [vmem:[#allocation2 + $0x960] sm:$0xff]
    %v1004 = vld [vmem:[#allocation2 + $0x968] sm:$0xff]
    %v1005 = vld [vmem:[#allocation2 + $0x970] sm:$0xff]
    %v1006 = vld [vmem:[#allocation2 + $0x978] sm:$0xff]
    %v1007 = vld [vmem:[#allocation2 + $0x980] sm:$0xff]
    %v1008 = vld [vmem:[#allocation2 + $0x988] sm:$0xff]
    %v1009 = vld [vmem:[#allocation2 + $0x990] sm:$0xff]
    %v1010 = vld [vmem:[#allocation2 + $0x998] sm:$0xff]
    %v1011 = vld [vmem:[#allocation2 + $0x9a0] sm:$0xff]
    %v1012 = vld [vmem:[#allocation2 + $0x9a8] sm:$0xff]
    %v1013 = vld [vmem:[#allocation2 + $0x9b0] sm:$0xff]
    %v1014 = vld [vmem:[#allocation2 + $0x9b8] sm:$0xff]
    %v1015 = vld [vmem:[#allocation2 + $0x9c0] sm:$0xff]
    %v1016 = vld [vmem:[#allocation2 + $0x9c8] sm:$0xff]
    %v1017 = vld [vmem:[#allocation2 + $0x9d0] sm:$0xff]
    %v1018 = vld [vmem:[#allocation2 + $0x9d8] sm:$0xff]
    %v1019 = vld [vmem:[#allocation2 + $0x9e0] sm:$0xff]
    %v1020 = vld [vmem:[#allocation2 + $0x9e8] sm:$0xff]
    %v1021 = vld [vmem:[#allocation2 + $0x9f0] sm:$0xff]
    %v1022 = vld [vmem:[#allocation2 + $0x9f8] sm:$0xff]
    %v1023 = vld [vmem:[#allocation2 + $0xa00] sm:$0xff]
    %v1024 = vld [vmem:[#allocation2 + $0xa08] sm:$0xff]
    %v1025 = vld [vmem:[#allocation2 + $0xa10] sm:$0xff]
    %v1026 = vld [vmem:[#allocation2 + $0xa18] sm:$0xff]
    %v1027 = vld [vmem:[#allocation2 + $0xa20] sm:$0xff]
    %v1028 = vld [vmem:[#allocation2 + $0xa28] sm:$0xff]
    %v1029 = vld [vmem:[#allocation2 + $0xa30] sm:$0xff]
    %v1030 = vld [vmem:[#allocation2 + $0xa38] sm:$0xff]
    %v1031 = vld [vmem:[#allocation2 + $0xa40] sm:$0xff]
    %v1032 = vld [vmem:[#allocation2 + $0xa48] sm:$0xff]
    %v1033 = vld [vmem:[#allocation2 + $0xa50] sm:$0xff]
    %v1034 = vld [vmem:[#allocation2 + $0xa58] sm:$0xff]
    %v1035 = vld [vmem:[#allocation2 + $0xa60] sm:$0xff]
    %v1036 = vld [vmem:[#allocation2 + $0xa68] sm:$0xff]
    %v1037 = vld [vmem:[#allocation2 + $0xa70] sm:$0xff]
    %v1038 = vld [vmem:[#allocation2 + $0xa78] sm:$0xff]
    %v1039 = vld [vmem:[#allocation2 + $0xa80] sm:$0xff]
    %v1040 = vld [vmem:[#allocation2 + $0xa88] sm:$0xff]
    %v1041 = vld [vmem:[#allocation2 + $0xa90] sm:$0xff]
    %v1042 = vld [vmem:[#allocation2 + $0xa98] sm:$0xff]
    %v1043 = vld [vmem:[#allocation2 + $0xaa0] sm:$0xff]
    %v1044 = vld [vmem:[#allocation2 + $0xaa8] sm:$0xff]
    %v1045 = vld [vmem:[#allocation2 + $0xab0] sm:$0xff]
    %v1046 = vld [vmem:[#allocation2 + $0xab8] sm:$0xff]
    %v1047 = vld [vmem:[#allocation2 + $0xac0] sm:$0xff]
    %v1048 = vld [vmem:[#allocation2 + $0xac8] sm:$0xff]
    %v1049 = vld [vmem:[#allocation2 + $0xad0] sm:$0xff]
    %v1050 = vld [vmem:[#allocation2 + $0xad8] sm:$0xff]
    %v1051 = vld [vmem:[#allocation2 + $0xae0] sm:$0xff]
    %v1052 = vld [vmem:[#allocation2 + $0xae8] sm:$0xff]
    %v1053 = vld [vmem:[#allocation2 + $0xaf0] sm:$0xff]
    %v1054 = vld [vmem:[#allocation2 + $0xaf8] sm:$0xff]
    %v1055 = vld [vmem:[#allocation2 + $0xb00] sm:$0xff]
    %v1056 = vld [vmem:[#allocation2 + $0xb08] sm:$0xff]
    %v1057 = vld [vmem:[#allocation2 + $0xb10] sm:$0xff]
    %v1058 = vld [vmem:[#allocation2 + $0xb18] sm:$0xff]
    %v1059 = vld [vmem:[#allocation2 + $0xb20] sm:$0xff]
    %v1060 = vld [vmem:[#allocation2 + $0xb28] sm:$0xff]
    %v1061 = vld [vmem:[#allocation2 + $0xb30] sm:$0xff]
    %v1062 = vld [vmem:[#allocation2 + $0xb38] sm:$0xff]
    %v1063 = vld [vmem:[#allocation2 + $0xb40] sm:$0xff]
    %v1064 = vld [vmem:[#allocation2 + $0xb48] sm:$0xff]
    %v1065 = vld [vmem:[#allocation2 + $0xb50] sm:$0xff]
    %v1066 = vld [vmem:[#allocation2 + $0xb58] sm:$0xff]
    %v1067 = vld [vmem:[#allocation2 + $0xb60] sm:$0xff]
    %v1068 = vld [vmem:[#allocation2 + $0xb68] sm:$0xff]
    %v1069 = vld [vmem:[#allocation2 + $0xb70] sm:$0xff]
    %v1070 = vld [vmem:[#allocation2 + $0xb78] sm:$0xff]
    %v1071 = vld [vmem:[#allocation2 + $0xb80] sm:$0xff]
    %v1072 = vld [vmem:[#allocation2 + $0xb88] sm:$0xff]
    %v1073 = vld [vmem:[#allocation2 + $0xb90] sm:$0xff]
    %v1074 = vld [vmem:[#allocation2 + $0xb98] sm:$0xff]
    %v1075 = vld [vmem:[#allocation2 + $0xba0] sm:$0xff]
    %v1076 = vld [vmem:[#allocation2 + $0xba8] sm:$0xff]
    %v1077 = vld [vmem:[#allocation2 + $0xbb0] sm:$0xff]
    %v1078 = vld [vmem:[#allocation2 + $0xbb8] sm:$0xff]
    %v1079 = vld [vmem:[#allocation2 + $0xbc0] sm:$0xff]
    %v1080 = vld [vmem:[#allocation2 + $0xbc8] sm:$0xff]
    %v1081 = vld [vmem:[#allocation2 + $0xbd0] sm:$0xff]
    %v1082 = vld [vmem:[#allocation2 + $0xbd8] sm:$0xff]
    %v1083 = vld [vmem:[#allocation2 + $0xbe0] sm:$0xff]
    %v1084 = vld [vmem:[#allocation2 + $0xbe8] sm:$0xff]
    %v1085 = vld [vmem:[#allocation2 + $0xbf0] sm:$0xff]
    %v1086 = vld [vmem:[#allocation2 + $0xbf8] sm:$0xff]
    %v1087 = vld [vmem:[#allocation2 + $0xc00] sm:$0xff]
    %v1088 = vld [vmem:[#allocation2 + $0xc08] sm:$0xff]
    %v1089 = vld [vmem:[#allocation2 + $0xc10] sm:$0xff]
    %v1090 = vld [vmem:[#allocation2 + $0xc18] sm:$0xff]
    %v1091 = vld [vmem:[#allocation2 + $0xc20] sm:$0xff]
    %v1092 = vld [vmem:[#allocation2 + $0xc28] sm:$0xff]
    %v1093 = vld [vmem:[#allocation2 + $0xc30] sm:$0xff]
    %v1094 = vld [vmem:[#allocation2 + $0xc38] sm:$0xff]
    %v1095 = vld [vmem:[#allocation2 + $0xc40] sm:$0xff]
    %v1096 = vld [vmem:[#allocation2 + $0xc48] sm:$0xff]
    %v1097 = vld [vmem:[#allocation2 + $0xc50] sm:$0xff]
    %v1098 = vld [vmem:[#allocation2 + $0xc58] sm:$0xff]
    %v1099 = vld [vmem:[#allocation2 + $0xc60] sm:$0xff]
    %v1100 = vld [vmem:[#allocation2 + $0xc68] sm:$0xff]
    %v1101 = vld [vmem:[#allocation2 + $0xc70] sm:$0xff]
    %v1102 = vld [vmem:[#allocation2 + $0xc78] sm:$0xff]
    %v1103 = vld [vmem:[#allocation2 + $0xc80] sm:$0xff]
    %v1104 = vld [vmem:[#allocation2 + $0xc88] sm:$0xff]
    %v1105 = vld [vmem:[#allocation2 + $0xc90] sm:$0xff]
    %v1106 = vld [vmem:[#allocation2 + $0xc98] sm:$0xff]
    %v1107 = vld [vmem:[#allocation2 + $0xca0] sm:$0xff]
    %v1108 = vld [vmem:[#allocation2 + $0xca8] sm:$0xff]
    %v1109 = vld [vmem:[#allocation2 + $0xcb0] sm:$0xff]
    %v1110 = vld [vmem:[#allocation2 + $0xcb8] sm:$0xff]
    %v1111 = vld [vmem:[#allocation2 + $0xcc0] sm:$0xff]
    %v1112 = vld [vmem:[#allocation2 + $0xcc8] sm:$0xff]
    %v1113 = vld [vmem:[#allocation2 + $0xcd0] sm:$0xff]
    %v1114 = vld [vmem:[#allocation2 + $0xcd8] sm:$0xff]
    %v1115 = vld [vmem:[#allocation2 + $0xce0] sm:$0xff]
    %v1116 = vld [vmem:[#allocation2 + $0xce8] sm:$0xff]
    %v1117 = vld [vmem:[#allocation2 + $0xcf0] sm:$0xff]
    %v1118 = vld [vmem:[#allocation2 + $0xcf8] sm:$0xff]
    %v1119 = vld [vmem:[#allocation2 + $0xd00] sm:$0xff]
    %v1120 = vld [vmem:[#allocation2 + $0xd08] sm:$0xff]
    %v1121 = vld [vmem:[#allocation2 + $0xd10] sm:$0xff]
    %v1122 = vld [vmem:[#allocation2 + $0xd18] sm:$0xff]
    %v1123 = vld [vmem:[#allocation2 + $0xd20] sm:$0xff]
    %v1124 = vld [vmem:[#allocation2 + $0xd28] sm:$0xff]
    %v1125 = vld [vmem:[#allocation2 + $0xd30] sm:$0xff]
    %v1126 = vld [vmem:[#allocation2 + $0xd38] sm:$0xff]
    %v1127 = vld [vmem:[#allocation2 + $0xd40] sm:$0xff]
    %v1128 = vld [vmem:[#allocation2 + $0xd48] sm:$0xff]
    %v1129 = vld [vmem:[#allocation2 + $0xd50] sm:$0xff]
    %v1130 = vld [vmem:[#allocation2 + $0xd58] sm:$0xff]
    %v1131 = vld [vmem:[#allocation2 + $0xd60] sm:$0xff]
    %v1132 = vld [vmem:[#allocation2 + $0xd68] sm:$0xff]
    %v1133 = vld [vmem:[#allocation2 + $0xd70] sm:$0xff]
    %v1134 = vld [vmem:[#allocation2 + $0xd78] sm:$0xff]
    %v1135 = vld [vmem:[#allocation2 + $0xd80] sm:$0xff]
    %v1136 = vld [vmem:[#allocation2 + $0xd88] sm:$0xff]
    %v1137 = vld [vmem:[#allocation2 + $0xd90] sm:$0xff]
    %v1138 = vld [vmem:[#allocation2 + $0xd98] sm:$0xff]
    %v1139 = vld [vmem:[#allocation2 + $0xda0] sm:$0xff]
    %v1140 = vld [vmem:[#allocation2 + $0xda8] sm:$0xff]
    %v1141 = vld [vmem:[#allocation2 + $0xdb0] sm:$0xff]
    %v1142 = vld [vmem:[#allocation2 + $0xdb8] sm:$0xff]
    %v1143 = vld [vmem:[#allocation2 + $0xdc0] sm:$0xff]
    %v1144 = vld [vmem:[#allocation2 + $0xdc8] sm:$0xff]
    %v1145 = vld [vmem:[#allocation2 + $0xdd0] sm:$0xff]
    %v1146 = vld [vmem:[#allocation2 + $0xdd8] sm:$0xff]
    %v1147 = vld [vmem:[#allocation2 + $0xde0] sm:$0xff]
    %v1148 = vld [vmem:[#allocation2 + $0xde8] sm:$0xff]
    %v1149 = vld [vmem:[#allocation2 + $0xdf0] sm:$0xff]
    %v1150 = vld [vmem:[#allocation2 + $0xdf8] sm:$0xff]
    %v1151 = vld [vmem:[#allocation2 + $0xe00] sm:$0xff]
    %v1152 = vld [vmem:[#allocation2 + $0xe08] sm:$0xff]
    %v1153 = vld [vmem:[#allocation2 + $0xe10] sm:$0xff]
    %v1154 = vld [vmem:[#allocation2 + $0xe18] sm:$0xff]
    %v1155 = vld [vmem:[#allocation2 + $0xe20] sm:$0xff]
    %v1156 = vld [vmem:[#allocation2 + $0xe28] sm:$0xff]
    %v1157 = vld [vmem:[#allocation2 + $0xe30] sm:$0xff]
    %v1158 = vld [vmem:[#allocation2 + $0xe38] sm:$0xff]
    %v1159 = vld [vmem:[#allocation2 + $0xe40] sm:$0xff]
    %v1160 = vld [vmem:[#allocation2 + $0xe48] sm:$0xff]
    %v1161 = vld [vmem:[#allocation2 + $0xe50] sm:$0xff]
    %v1162 = vld [vmem:[#allocation2 + $0xe58] sm:$0xff]
    %v1163 = vld [vmem:[#allocation2 + $0xe60] sm:$0xff]
    %v1164 = vld [vmem:[#allocation2 + $0xe68] sm:$0xff]
    %v1165 = vld [vmem:[#allocation2 + $0xe70] sm:$0xff]
    %v1166 = vld [vmem:[#allocation2 + $0xe78] sm:$0xff]
    %v1167 = vld [vmem:[#allocation2 + $0xe80] sm:$0xff]
    %v1168 = vld [vmem:[#allocation2 + $0xe88] sm:$0xff]
    %v1169 = vld [vmem:[#allocation2 + $0xe90] sm:$0xff]
    %v1170 = vld [vmem:[#allocation2 + $0xe98] sm:$0xff]
    %v1171 = vld [vmem:[#allocation2 + $0xea0] sm:$0xff]
    %v1172 = vld [vmem:[#allocation2 + $0xea8] sm:$0xff]
    %v1173 = vld [vmem:[#allocation2 + $0xeb0] sm:$0xff]
    %v1174 = vld [vmem:[#allocation2 + $0xeb8] sm:$0xff]
    %v1175 = vld [vmem:[#allocation2 + $0xec0] sm:$0xff]
    %v1176 = vld [vmem:[#allocation2 + $0xec8] sm:$0xff]
    %v1177 = vld [vmem:[#allocation2 + $0xed0] sm:$0xff]
    %v1178 = vld [vmem:[#allocation2 + $0xed8] sm:$0xff]
    %v1179 = vld [vmem:[#allocation2 + $0xee0] sm:$0xff]
    %v1180 = vld [vmem:[#allocation2 + $0xee8] sm:$0xff]
    %v1181 = vld [vmem:[#allocation2 + $0xef0] sm:$0xff]
    %v1182 = vld [vmem:[#allocation2 + $0xef8] sm:$0xff]
    %v1183 = vld [vmem:[#allocation2 + $0xf00] sm:$0xff]
    %v1184 = vld [vmem:[#allocation2 + $0xf08] sm:$0xff]
    %v1185 = vld [vmem:[#allocation2 + $0xf10] sm:$0xff]
    %v1186 = vld [vmem:[#allocation2 + $0xf18] sm:$0xff]
    %v1187 = vld [vmem:[#allocation2 + $0xf20] sm:$0xff]
    %v1188 = vld [vmem:[#allocation2 + $0xf28] sm:$0xff]
    %v1189 = vld [vmem:[#allocation2 + $0xf30] sm:$0xff]
    %v1190 = vld [vmem:[#allocation2 + $0xf38] sm:$0xff]
    %v1191 = vld [vmem:[#allocation2 + $0xf40] sm:$0xff]
    %v1192 = vld [vmem:[#allocation2 + $0xf48] sm:$0xff]
    %v1193 = vld [vmem:[#allocation2 + $0xf50] sm:$0xff]
    %v1194 = vld [vmem:[#allocation2 + $0xf58] sm:$0xff]
    %v1195 = vld [vmem:[#allocation2 + $0xf60] sm:$0xff]
    %v1196 = vld [vmem:[#allocation2 + $0xf68] sm:$0xff]
    %v1197 = vld [vmem:[#allocation2 + $0xf70] sm:$0xff]
    %v1198 = vld [vmem:[#allocation2 + $0xf78] sm:$0xff]
    %v1199 = vld [vmem:[#allocation2 + $0xf80] sm:$0xff]
    %v1200 = vld [vmem:[#allocation2 + $0xf88] sm:$0xff]
    %v1201 = vld [vmem:[#allocation2 + $0xf90] sm:$0xff]
    %v1202 = vld [vmem:[#allocation2 + $0xf98] sm:$0xff]
    %v1203 = vld [vmem:[#allocation2 + $0xfa0] sm:$0xff]
    %v1204 = vld [vmem:[#allocation2 + $0xfa8] sm:$0xff]
    %v1205 = vld [vmem:[#allocation2 + $0xfb0] sm:$0xff]
    %v1206 = vld [vmem:[#allocation2 + $0xfb8] sm:$0xff]
    %v1207 = vld [vmem:[#allocation2 + $0xfc0] sm:$0xff]
    %v1208 = vld [vmem:[#allocation2 + $0xfc8] sm:$0xff]
    %v1209 = vld [vmem:[#allocation2 + $0xfd0] sm:$0xff]
    %v1210 = vld [vmem:[#allocation2 + $0xfd8] sm:$0xff]
    %v1211 = vld [vmem:[#allocation2 + $0xfe0] sm:$0xff]
    %v1212 = vld [vmem:[#allocation2 + $0xfe8] sm:$0xff]
    %v1213 = vld [vmem:[#allocation2 + $0xff0] sm:$0xff]
    %v1214 = vld [vmem:[#allocation2 + $0xff8] sm:$0xff]
    %1215 = vmatprep.subr.bf16.mxu0 %v704
    %1216 = vmatpush1.bf16.msra.mxu0 %v703
    %1217 = vmatprep.subr.bf16.mxu0 %v712
    %1218 = vmatpush1.bf16.msra.mxu0 %v711
    %1219 = vmatprep.subr.bf16.mxu0 %v720
    %1220 = vmatpush1.bf16.msra.mxu0 %v719
    %1221 = vmatprep.subr.bf16.mxu0 %v728
    %1222 = vmatpush1.bf16.msra.mxu0 %v727
    %1223 = vmatprep.subr.bf16.mxu0 %v736
    %1224 = vmatpush1.bf16.msra.mxu0 %v735
    %1225 = vmatprep.subr.bf16.mxu0 %v744
    %1226 = vmatpush1.bf16.msra.mxu0 %v743
    %1227 = vmatprep.subr.bf16.mxu0 %v752
    %1228 = vmatpush1.bf16.msra.mxu0 %v751
    %1229 = vmatprep.subr.bf16.mxu0 %v760
    %1230 = vmatpush1.bf16.msra.mxu0 %v759
    %1231 = vmatprep.subr.bf16.mxu0 %v768
    %1232 = vmatpush1.bf16.msra.mxu0 %v767
    %1233 = vmatprep.subr.bf16.mxu0 %v776
    %1234 = vmatpush1.bf16.msra.mxu0 %v775
    %1235 = vmatprep.subr.bf16.mxu0 %v784
    %1236 = vmatpush1.bf16.msra.mxu0 %v783
    %1237 = vmatprep.subr.bf16.mxu0 %v792
    %1238 = vmatpush1.bf16.msra.mxu0 %v791
    %1239 = vmatprep.subr.bf16.mxu0 %v800
    %1240 = vmatpush1.bf16.msra.mxu0 %v799
    %1241 = vmatprep.subr.bf16.mxu0 %v808
    %1242 = vmatpush1.bf16.msra.mxu0 %v807
    %1243 = vmatprep.subr.bf16.mxu0 %v816
    %1244 = vmatpush1.bf16.msra.mxu0 %v815
    %1245 = vmatprep.subr.bf16.mxu0 %v824
    %1246 = vmatpush1.bf16.msra.mxu0 %v823
    %1247 = vmatprep.mubr.bf16.mxu0 %v696
    %1248 = vmatmul.mubr.bf16.gmra.mrb[0].mxu0 %v695
    %v1249 = vpop.f32.mrb[0].mxu0
    %v1250 = vadd.f32 0.0, %v1249
    %v1251 = vpop.f32.mrb[0].mxu0
    %v1252 = vadd.f32 0.0, %v1251
    %v1253 = vpop.f32.mrb[0].mxu0
    %v1254 = vpop.f32.mrb[0].mxu0
    %1255 = vdwg.mxu0
    %1256 = vmatprep.subr.bf16.mxu0 %v832
    %1257 = vmatpush1.bf16.msra.mxu0 %v831
    %1258 = vmatprep.subr.bf16.mxu0 %v840
    %1259 = vmatpush1.bf16.msra.mxu0 %v839
    %1260 = vmatprep.subr.bf16.mxu0 %v848
    %1261 = vmatpush1.bf16.msra.mxu0 %v847
    %1262 = vmatprep.subr.bf16.mxu0 %v856
    %1263 = vmatpush1.bf16.msra.mxu0 %v855
    %1264 = vmatprep.subr.bf16.mxu0 %v864
    %1265 = vmatpush1.bf16.msra.mxu0 %v863
    %1266 = vmatprep.subr.bf16.mxu0 %v872
    %1267 = vmatpush1.bf16.msra.mxu0 %v871
    %1268 = vmatprep.subr.bf16.mxu0 %v880
    %1269 = vmatpush1.bf16.msra.mxu0 %v879
    %1270 = vmatprep.subr.bf16.mxu0 %v888
    %1271 = vmatpush1.bf16.msra.mxu0 %v887
    %1272 = vmatprep.subr.bf16.mxu0 %v896
    %1273 = vmatpush1.bf16.msra.mxu0 %v895
    %1274 = vmatprep.subr.bf16.mxu0 %v904
    %1275 = vmatpush1.bf16.msra.mxu0 %v903
    %1276 = vmatprep.subr.bf16.mxu0 %v912
    %1277 = vmatpush1.bf16.msra.mxu0 %v911
    %1278 = vmatprep.subr.bf16.mxu0 %v920
    %1279 = vmatpush1.bf16.msra.mxu0 %v919
    %1280 = vmatprep.subr.bf16.mxu0 %v928
    %1281 = vmatpush1.bf16.msra.mxu0 %v927
    %1282 = vmatprep.subr.bf16.mxu0 %v936
    %1283 = vmatpush1.bf16.msra.mxu0 %v935
    %1284 = vmatprep.subr.bf16.mxu0 %v944
    %1285 = vmatpush1.bf16.msra.mxu0 %v943
    %1286 = vmatprep.subr.bf16.mxu0 %v952
    %1287 = vmatpush1.bf16.msra.mxu0 %v951
    %1288 = vmatprep.mubr.bf16.mxu0 %v698
    %1289 = vmatmul.mubr.bf16.gmra.mrb[0].mxu0 %v697
    %v1290 = vpop.f32.mrb[0].mxu0
    %v1291 = vadd.f32 %v1250, %v1290
    %v1292 = vpop.f32.mrb[0].mxu0
    %v1293 = vadd.f32 %v1252, %v1292
    %v1294 = vpop.f32.mrb[0].mxu0
    %v1295 = vpop.f32.mrb[0].mxu0
    %1296 = vdwg.mxu0
    %1297 = vmatprep.subr.bf16.mxu0 %v960
    %1298 = vmatpush1.bf16.msra.mxu0 %v959
    %1299 = vmatprep.subr.bf16.mxu0 %v968
    %1300 = vmatpush1.bf16.msra.mxu0 %v967
    %1301 = vmatprep.subr.bf16.mxu0 %v976
    %1302 = vmatpush1.bf16.msra.mxu0 %v975
    %1303 = vmatprep.subr.bf16.mxu0 %v984
    %1304 = vmatpush1.bf16.msra.mxu0 %v983
    %1305 = vmatprep.subr.bf16.mxu0 %v992
    %1306 = vmatpush1.bf16.msra.mxu0 %v991
    %1307 = vmatprep.subr.bf16.mxu0 %v1000
    %1308 = vmatpush1.bf16.msra.mxu0 %v999
    %1309 = vmatprep.subr.bf16.mxu0 %v1008
    %1310 = vmatpush1.bf16.msra.mxu0 %v1007
    %1311 = vmatprep.subr.bf16.mxu0 %v1016
    %1312 = vmatpush1.bf16.msra.mxu0 %v1015
    %1313 = vmatprep.subr.bf16.mxu0 %v1024
    %1314 = vmatpush1.bf16.msra.mxu0 %v1023
    %1315 = vmatprep.subr.bf16.mxu0 %v1032
    %1316 = vmatpush1.bf16.msra.mxu0 %v1031
    %1317 = vmatprep.subr.bf16.mxu0 %v1040
    %1318 = vmatpush1.bf16.msra.mxu0 %v1039
    %1319 = vmatprep.subr.bf16.mxu0 %v1048
    %1320 = vmatpush1.bf16.msra.mxu0 %v1047
    %1321 = vmatprep.subr.bf16.mxu0 %v1056
    %1322 = vmatpush1.bf16.msra.mxu0 %v1055
    %1323 = vmatprep.subr.bf16.mxu0 %v1064
    %1324 = vmatpush1.bf16.msra.mxu0 %v1063
    %1325 = vmatprep.subr.bf16.mxu0 %v1072
    %1326 = vmatpush1.bf16.msra.mxu0 %v1071
    %1327 = vmatprep.subr.bf16.mxu0 %v1080
    %1328 = vmatpush1.bf16.msra.mxu0 %v1079
    %1329 = vmatprep.mubr.bf16.mxu0 %v700
    %1330 = vmatmul.mubr.bf16.gmra.mrb[0].mxu0 %v699
    %v1331 = vpop.f32.mrb[0].mxu0
    %v1332 = vadd.f32 %v1291, %v1331
    %v1333 = vpop.f32.mrb[0].mxu0
    %v1334 = vadd.f32 %v1293, %v1333
    %v1335 = vpop.f32.mrb[0].mxu0
    %v1336 = vpop.f32.mrb[0].mxu0
    %1337 = vdwg.mxu0
    %1338 = vmatprep.subr.bf16.mxu0 %v1088
    %1339 = vmatpush1.bf16.msra.mxu0 %v1087
    %1340 = vmatprep.subr.bf16.mxu0 %v1096
    %1341 = vmatpush1.bf16.msra.mxu0 %v1095
    %1342 = vmatprep.subr.bf16.mxu0 %v1104
    %1343 = vmatpush1.bf16.msra.mxu0 %v1103
    %1344 = vmatprep.subr.bf16.mxu0 %v1112
    %1345 = vmatpush1.bf16.msra.mxu0 %v1111
    %1346 = vmatprep.subr.bf16.mxu0 %v1120
    %1347 = vmatpush1.bf16.msra.mxu0 %v1119
    %1348 = vmatprep.subr.bf16.mxu0 %v1128
    %1349 = vmatpush1.bf16.msra.mxu0 %v1127
    %1350 = vmatprep.subr.bf16.mxu0 %v1136
    %1351 = vmatpush1.bf16.msra.mxu0 %v1135
    %1352 = vmatprep.subr.bf16.mxu0 %v1144
    %1353 = vmatpush1.bf16.msra.mxu0 %v1143
    %1354 = vmatprep.subr.bf16.mxu0 %v1152
    %1355 = vmatpush1.bf16.msra.mxu0 %v1151
    %1356 = vmatprep.subr.bf16.mxu0 %v1160
    %1357 = vmatpush1.bf16.msra.mxu0 %v1159
    %1358 = vmatprep.subr.bf16.mxu0 %v1168
    %1359 = vmatpush1.bf16.msra.mxu0 %v1167
    %1360 = vmatprep.subr.bf16.mxu0 %v1176
    %1361 = vmatpush1.bf16.msra.mxu0 %v1175
    %1362 = vmatprep.subr.bf16.mxu0 %v1184
    %1363 = vmatpush1.bf16.msra.mxu0 %v1183
    %1364 = vmatprep.subr.bf16.mxu0 %v1192
    %1365 = vmatpush1.bf16.msra.mxu0 %v1191
    %1366 = vmatprep.subr.bf16.mxu0 %v1200
    %1367 = vmatpush1.bf16.msra.mxu0 %v1199
    %1368 = vmatprep.subr.bf16.mxu0 %v1208
    %1369 = vmatpush1.bf16.msra.mxu0 %v1207
    %1370 = vmatprep.mubr.bf16.mxu0 %v702
    %1371 = vmatmul.mubr.bf16.gmra.mrb[0].mxu0 %v701
    %v1372 = vpop.f32.mrb[0].mxu0
    %v1373 = vadd.f32 %v1332, %v1372
    %v1374 = vpop.f32.mrb[0].mxu0
    %v1375 = vadd.f32 %v1334, %v1374
    %v1376 = vpop.f32.mrb[0].mxu0
    %v1377 = vpop.f32.mrb[0].mxu0
    %1378 = vdwg.mxu0
    %1379 = vmatprep.subr.bf16.mxu0 %v706
    %1380 = vmatpush1.bf16.msra.mxu0 %v705
    %1381 = vmatprep.subr.bf16.mxu0 %v714
    %1382 = vmatpush1.bf16.msra.mxu0 %v713
    %1383 = vmatprep.subr.bf16.mxu0 %v722
    %1384 = vmatpush1.bf16.msra.mxu0 %v721
    %1385 = vmatprep.subr.bf16.mxu0 %v730
    %1386 = vmatpush1.bf16.msra.mxu0 %v729
    %1387 = vmatprep.subr.bf16.mxu0 %v738
    %1388 = vmatpush1.bf16.msra.mxu0 %v737
    %1389 = vmatprep.subr.bf16.mxu0 %v746
    %1390 = vmatpush1.bf16.msra.mxu0 %v745
    %1391 = vmatprep.subr.bf16.mxu0 %v754
    %1392 = vmatpush1.bf16.msra.mxu0 %v753
    %1393 = vmatprep.subr.bf16.mxu0 %v762
    %1394 = vmatpush1.bf16.msra.mxu0 %v761
    %1395 = vmatprep.subr.bf16.mxu0 %v770
    %1396 = vmatpush1.bf16.msra.mxu0 %v769
    %1397 = vmatprep.subr.bf16.mxu0 %v778
    %1398 = vmatpush1.bf16.msra.mxu0 %v777
    %1399 = vmatprep.subr.bf16.mxu0 %v786
    %1400 = vmatpush1.bf16.msra.mxu0 %v785
    %1401 = vmatprep.subr.bf16.mxu0 %v794
    %1402 = vmatpush1.bf16.msra.mxu0 %v793
    %1403 = vmatprep.subr.bf16.mxu0 %v802
    %1404 = vmatpush1.bf16.msra.mxu0 %v801
    %1405 = vmatprep.subr.bf16.mxu0 %v810
    %1406 = vmatpush1.bf16.msra.mxu0 %v809
    %1407 = vmatprep.subr.bf16.mxu0 %v818
    %1408 = vmatpush1.bf16.msra.mxu0 %v817
    %1409 = vmatprep.subr.bf16.mxu0 %v826
    %1410 = vmatpush1.bf16.msra.mxu0 %v825
    %1411 = vmatprep.mubr.bf16.mxu0 %v696
    %1412 = vmatmul.mubr.bf16.gmra.mrb[0].mxu0 %v695
    %v1413 = vpop.f32.mrb[0].mxu0
    %v1414 = vadd.f32 0.0, %v1413
    %v1415 = vpop.f32.mrb[0].mxu0
    %v1416 = vadd.f32 0.0, %v1415
    %v1417 = vpop.f32.mrb[0].mxu0
    %v1418 = vpop.f32.mrb[0].mxu0
    %1419 = vdwg.mxu0
    %1420 = vmatprep.subr.bf16.mxu0 %v834
    %1421 = vmatpush1.bf16.msra.mxu0 %v833
    %1422 = vmatprep.subr.bf16.mxu0 %v842
    %1423 = vmatpush1.bf16.msra.mxu0 %v841
    %1424 = vmatprep.subr.bf16.mxu0 %v850
    %1425 = vmatpush1.bf16.msra.mxu0 %v849
    %1426 = vmatprep.subr.bf16.mxu0 %v858
    %1427 = vmatpush1.bf16.msra.mxu0 %v857
    %1428 = vmatprep.subr.bf16.mxu0 %v866
    %1429 = vmatpush1.bf16.msra.mxu0 %v865
    %1430 = vmatprep.subr.bf16.mxu0 %v874
    %1431 = vmatpush1.bf16.msra.mxu0 %v873
    %1432 = vmatprep.subr.bf16.mxu0 %v882
    %1433 = vmatpush1.bf16.msra.mxu0 %v881
    %1434 = vmatprep.subr.bf16.mxu0 %v890
    %1435 = vmatpush1.bf16.msra.mxu0 %v889
    %1436 = vmatprep.subr.bf16.mxu0 %v898
    %1437 = vmatpush1.bf16.msra.mxu0 %v897
    %1438 = vmatprep.subr.bf16.mxu0 %v906
    %1439 = vmatpush1.bf16.msra.mxu0 %v905
    %1440 = vmatprep.subr.bf16.mxu0 %v914
    %1441 = vmatpush1.bf16.msra.mxu0 %v913
    %1442 = vmatprep.subr.bf16.mxu0 %v922
    %1443 = vmatpush1.bf16.msra.mxu0 %v921
    %1444 = vmatprep.subr.bf16.mxu0 %v930
    %1445 = vmatpush1.bf16.msra.mxu0 %v929
    %1446 = vmatprep.subr.bf16.mxu0 %v938
    %1447 = vmatpush1.bf16.msra.mxu0 %v937
    %1448 = vmatprep.subr.bf16.mxu0 %v946
    %1449 = vmatpush1.bf16.msra.mxu0 %v945
    %1450 = vmatprep.subr.bf16.mxu0 %v954
    %1451 = vmatpush1.bf16.msra.mxu0 %v953
    %1452 = vmatprep.mubr.bf16.mxu0 %v698
    %1453 = vmatmul.mubr.bf16.gmra.mrb[0].mxu0 %v697
    %v1454 = vpop.f32.mrb[0].mxu0
    %v1455 = vadd.f32 %v1414, %v1454
    %v1456 = vpop.f32.mrb[0].mxu0
    %v1457 = vadd.f32 %v1416, %v1456
    %v1458 = vpop.f32.mrb[0].mxu0
    %v1459 = vpop.f32.mrb[0].mxu0
    %1460 = vdwg.mxu0
    %1461 = vmatprep.subr.bf16.mxu0 %v962
    %1462 = vmatpush1.bf16.msra.mxu0 %v961
    %1463 = vmatprep.subr.bf16.mxu0 %v970
    %1464 = vmatpush1.bf16.msra.mxu0 %v969
    %1465 = vmatprep.subr.bf16.mxu0 %v978
    %1466 = vmatpush1.bf16.msra.mxu0 %v977
    %1467 = vmatprep.subr.bf16.mxu0 %v986
    %1468 = vmatpush1.bf16.msra.mxu0 %v985
    %1469 = vmatprep.subr.bf16.mxu0 %v994
    %1470 = vmatpush1.bf16.msra.mxu0 %v993
    %1471 = vmatprep.subr.bf16.mxu0 %v1002
    %1472 = vmatpush1.bf16.msra.mxu0 %v1001
    %1473 = vmatprep.subr.bf16.mxu0 %v1010
    %1474 = vmatpush1.bf16.msra.mxu0 %v1009
    %1475 = vmatprep.subr.bf16.mxu0 %v1018
    %1476 = vmatpush1.bf16.msra.mxu0 %v1017
    %1477 = vmatprep.subr.bf16.mxu0 %v1026
    %1478 = vmatpush1.bf16.msra.mxu0 %v1025
    %1479 = vmatprep.subr.bf16.mxu0 %v1034
    %1480 = vmatpush1.bf16.msra.mxu0 %v1033
    %1481 = vmatprep.subr.bf16.mxu0 %v1042
    %1482 = vmatpush1.bf16.msra.mxu0 %v1041
    %1483 = vmatprep.subr.bf16.mxu0 %v1050
    %1484 = vmatpush1.bf16.msra.mxu0 %v1049
    %1485 = vmatprep.subr.bf16.mxu0 %v1058
    %1486 = vmatpush1.bf16.msra.mxu0 %v1057
    %1487 = vmatprep.subr.bf16.mxu0 %v1066
    %1488 = vmatpush1.bf16.msra.mxu0 %v1065
    %1489 = vmatprep.subr.bf16.mxu0 %v1074
    %1490 = vmatpush1.bf16.msra.mxu0 %v1073
    %1491 = vmatprep.subr.bf16.mxu0 %v1082
    %1492 = vmatpush1.bf16.msra.mxu0 %v1081
    %1493 = vmatprep.mubr.bf16.mxu0 %v700
    %1494 = vmatmul.mubr.bf16.gmra.mrb[0].mxu0 %v699
    %v1495 = vpop.f32.mrb[0].mxu0
    %v1496 = vadd.f32 %v1455, %v1495
    %v1497 = vpop.f32.mrb[0].mxu0
    %v1498 = vadd.f32 %v1457, %v1497
    %v1499 = vpop.f32.mrb[0].mxu0
    %v1500 = vpop.f32.mrb[0].mxu0
    %1501 = vdwg.mxu0
    %1502 = vmatprep.subr.bf16.mxu0 %v1090
    %1503 = vmatpush1.bf16.msra.mxu0 %v1089
    %1504 = vmatprep.subr.bf16.mxu0 %v1098
    %1505 = vmatpush1.bf16.msra.mxu0 %v1097
    %1506 = vmatprep.subr.bf16.mxu0 %v1106
    %1507 = vmatpush1.bf16.msra.mxu0 %v1105
    %1508 = vmatprep.subr.bf16.mxu0 %v1114
    %1509 = vmatpush1.bf16.msra.mxu0 %v1113
    %1510 = vmatprep.subr.bf16.mxu0 %v1122
    %1511 = vmatpush1.bf16.msra.mxu0 %v1121
    %1512 = vmatprep.subr.bf16.mxu0 %v1130
    %1513 = vmatpush1.bf16.msra.mxu0 %v1129
    %1514 = vmatprep.subr.bf16.mxu0 %v1138
    %1515 = vmatpush1.bf16.msra.mxu0 %v1137
    %1516 = vmatprep.subr.bf16.mxu0 %v1146
    %1517 = vmatpush1.bf16.msra.mxu0 %v1145
    %1518 = vmatprep.subr.bf16.mxu0 %v1154
    %1519 = vmatpush1.bf16.msra.mxu0 %v1153
    %1520 = vmatprep.subr.bf16.mxu0 %v1162
    %1521 = vmatpush1.bf16.msra.mxu0 %v1161
    %1522 = vmatprep.subr.bf16.mxu0 %v1170
    %1523 = vmatpush1.bf16.msra.mxu0 %v1169
    %1524 = vmatprep.subr.bf16.mxu0 %v1178
    %1525 = vmatpush1.bf16.msra.mxu0 %v1177
    %1526 = vmatprep.subr.bf16.mxu0 %v1186
    %1527 = vmatpush1.bf16.msra.mxu0 %v1185
    %1528 = vmatprep.subr.bf16.mxu0 %v1194
    %1529 = vmatpush1.bf16.msra.mxu0 %v1193
    %1530 = vmatprep.subr.bf16.mxu0 %v1202
    %1531 = vmatpush1.bf16.msra.mxu0 %v1201
    %1532 = vmatprep.subr.bf16.mxu0 %v1210
    %1533 = vmatpush1.bf16.msra.mxu0 %v1209
    %1534 = vmatprep.mubr.bf16.mxu0 %v702
    %1535 = vmatmul.mubr.bf16.gmra.mrb[0].mxu0 %v701
    %v1536 = vpop.f32.mrb[0].mxu0
    %v1537 = vadd.f32 %v1496, %v1536
    %v1538 = vpop.f32.mrb[0].mxu0
    %v1539 = vadd.f32 %v1498, %v1538
    %v1540 = vpop.f32.mrb[0].mxu0
    %v1541 = vpop.f32.mrb[0].mxu0
    %1542 = vdwg.mxu0
    %1543 = vmatprep.subr.bf16.mxu0 %v708
    %1544 = vmatpush1.bf16.msra.mxu0 %v707
    %1545 = vmatprep.subr.bf16.mxu0 %v716
    %1546 = vmatpush1.bf16.msra.mxu0 %v715
    %1547 = vmatprep.subr.bf16.mxu0 %v724
    %1548 = vmatpush1.bf16.msra.mxu0 %v723
    %1549 = vmatprep.subr.bf16.mxu0 %v732
    %1550 = vmatpush1.bf16.msra.mxu0 %v731
    %1551 = vmatprep.subr.bf16.mxu0 %v740
    %1552 = vmatpush1.bf16.msra.mxu0 %v739
    %1553 = vmatprep.subr.bf16.mxu0 %v748
    %1554 = vmatpush1.bf16.msra.mxu0 %v747
    %1555 = vmatprep.subr.bf16.mxu0 %v756
    %1556 = vmatpush1.bf16.msra.mxu0 %v755
    %1557 = vmatprep.subr.bf16.mxu0 %v764
    %1558 = vmatpush1.bf16.msra.mxu0 %v763
    %1559 = vmatprep.subr.bf16.mxu0 %v772
    %1560 = vmatpush1.bf16.msra.mxu0 %v771
    %1561 = vmatprep.subr.bf16.mxu0 %v780
    %1562 = vmatpush1.bf16.msra.mxu0 %v779
    %1563 = vmatprep.subr.bf16.mxu0 %v788
    %1564 = vmatpush1.bf16.msra.mxu0 %v787
    %1565 = vmatprep.subr.bf16.mxu0 %v796
    %1566 = vmatpush1.bf16.msra.mxu0 %v795
    %1567 = vmatprep.subr.bf16.mxu0 %v804
    %1568 = vmatpush1.bf16.msra.mxu0 %v803
    %1569 = vmatprep.subr.bf16.mxu0 %v812
    %1570 = vmatpush1.bf16.msra.mxu0 %v811
    %1571 = vmatprep.subr.bf16.mxu0 %v820
    %1572 = vmatpush1.bf16.msra.mxu0 %v819
    %1573 = vmatprep.subr.bf16.mxu0 %v828
    %1574 = vmatpush1.bf16.msra.mxu0 %v827
    %1575 = vmatprep.mubr.bf16.mxu0 %v696
    %1576 = vmatmul.mubr.bf16.gmra.mrb[0].mxu0 %v695
    %v1577 = vpop.f32.mrb[0].mxu0
    %v1578 = vadd.f32 0.0, %v1577
    %v1579 = vpop.f32.mrb[0].mxu0
    %v1580 = vadd.f32 0.0, %v1579
    %v1581 = vpop.f32.mrb[0].mxu0
    %v1582 = vpop.f32.mrb[0].mxu0
    %1583 = vdwg.mxu0
    %1584 = vmatprep.subr.bf16.mxu0 %v836
    %1585 = vmatpush1.bf16.msra.mxu0 %v835
    %1586 = vmatprep.subr.bf16.mxu0 %v844
    %1587 = vmatpush1.bf16.msra.mxu0 %v843
    %1588 = vmatprep.subr.bf16.mxu0 %v852
    %1589 = vmatpush1.bf16.msra.mxu0 %v851
    %1590 = vmatprep.subr.bf16.mxu0 %v860
    %1591 = vmatpush1.bf16.msra.mxu0 %v859
    %1592 = vmatprep.subr.bf16.mxu0 %v868
    %1593 = vmatpush1.bf16.msra.mxu0 %v867
    %1594 = vmatprep.subr.bf16.mxu0 %v876
    %1595 = vmatpush1.bf16.msra.mxu0 %v875
    %1596 = vmatprep.subr.bf16.mxu0 %v884
    %1597 = vmatpush1.bf16.msra.mxu0 %v883
    %1598 = vmatprep.subr.bf16.mxu0 %v892
    %1599 = vmatpush1.bf16.msra.mxu0 %v891
    %1600 = vmatprep.subr.bf16.mxu0 %v900
    %1601 = vmatpush1.bf16.msra.mxu0 %v899
    %1602 = vmatprep.subr.bf16.mxu0 %v908
    %1603 = vmatpush1.bf16.msra.mxu0 %v907
    %1604 = vmatprep.subr.bf16.mxu0 %v916
    %1605 = vmatpush1.bf16.msra.mxu0 %v915
    %1606 = vmatprep.subr.bf16.mxu0 %v924
    %1607 = vmatpush1.bf16.msra.mxu0 %v923
    %1608 = vmatprep.subr.bf16.mxu0 %v932
    %1609 = vmatpush1.bf16.msra.mxu0 %v931
    %1610 = vmatprep.subr.bf16.mxu0 %v940
    %1611 = vmatpush1.bf16.msra.mxu0 %v939
    %1612 = vmatprep.subr.bf16.mxu0 %v948
    %1613 = vmatpush1.bf16.msra.mxu0 %v947
    %1614 = vmatprep.subr.bf16.mxu0 %v956
    %1615 = vmatpush1.bf16.msra.mxu0 %v955
    %1616 = vmatprep.mubr.bf16.mxu0 %v698
    %1617 = vmatmul.mubr.bf16.gmra.mrb[0].mxu0 %v697
    %v1618 = vpop.f32.mrb[0].mxu0
    %v1619 = vadd.f32 %v1578, %v1618
    %v1620 = vpop.f32.mrb[0].mxu0
    %v1621 = vadd.f32 %v1580, %v1620
    %v1622 = vpop.f32.mrb[0].mxu0
    %v1623 = vpop.f32.mrb[0].mxu0
    %1624 = vdwg.mxu0
    %1625 = vmatprep.subr.bf16.mxu0 %v964
    %1626 = vmatpush1.bf16.msra.mxu0 %v963
    %1627 = vmatprep.subr.bf16.mxu0 %v972
    %1628 = vmatpush1.bf16.msra.mxu0 %v971
    %1629 = vmatprep.subr.bf16.mxu0 %v980
    %1630 = vmatpush1.bf16.msra.mxu0 %v979
    %1631 = vmatprep.subr.bf16.mxu0 %v988
    %1632 = vmatpush1.bf16.msra.mxu0 %v987
    %1633 = vmatprep.subr.bf16.mxu0 %v996
    %1634 = vmatpush1.bf16.msra.mxu0 %v995
    %1635 = vmatprep.subr.bf16.mxu0 %v1004
    %1636 = vmatpush1.bf16.msra.mxu0 %v1003
    %1637 = vmatprep.subr.bf16.mxu0 %v1012
    %1638 = vmatpush1.bf16.msra.mxu0 %v1011
    %1639 = vmatprep.subr.bf16.mxu0 %v1020
    %1640 = vmatpush1.bf16.msra.mxu0 %v1019
    %1641 = vmatprep.subr.bf16.mxu0 %v1028
    %1642 = vmatpush1.bf16.msra.mxu0 %v1027
    %1643 = vmatprep.subr.bf16.mxu0 %v1036
    %1644 = vmatpush1.bf16.msra.mxu0 %v1035
    %1645 = vmatprep.subr.bf16.mxu0 %v1044
    %1646 = vmatpush1.bf16.msra.mxu0 %v1043
    %1647 = vmatprep.subr.bf16.mxu0 %v1052
    %1648 = vmatpush1.bf16.msra.mxu0 %v1051
    %1649 = vmatprep.subr.bf16.mxu0 %v1060
    %1650 = vmatpush1.bf16.msra.mxu0 %v1059
    %1651 = vmatprep.subr.bf16.mxu0 %v1068
    %1652 = vmatpush1.bf16.msra.mxu0 %v1067
    %1653 = vmatprep.subr.bf16.mxu0 %v1076
    %1654 = vmatpush1.bf16.msra.mxu0 %v1075
    %1655 = vmatprep.subr.bf16.mxu0 %v1084
    %1656 = vmatpush1.bf16.msra.mxu0 %v1083
    %1657 = vmatprep.mubr.bf16.mxu0 %v700
    %1658 = vmatmul.mubr.bf16.gmra.mrb[0].mxu0 %v699
    %v1659 = vpop.f32.mrb[0].mxu0
    %v1660 = vadd.f32 %v1619, %v1659
    %v1661 = vpop.f32.mrb[0].mxu0
    %v1662 = vadd.f32 %v1621, %v1661
    %v1663 = vpop.f32.mrb[0].mxu0
    %v1664 = vpop.f32.mrb[0].mxu0
    %1665 = vdwg.mxu0
    %1666 = vmatprep.subr.bf16.mxu0 %v1092
    %1667 = vmatpush1.bf16.msra.mxu0 %v1091
    %1668 = vmatprep.subr.bf16.mxu0 %v1100
    %1669 = vmatpush1.bf16.msra.mxu0 %v1099
    %1670 = vmatprep.subr.bf16.mxu0 %v1108
    %1671 = vmatpush1.bf16.msra.mxu0 %v1107
    %1672 = vmatprep.subr.bf16.mxu0 %v1116
    %1673 = vmatpush1.bf16.msra.mxu0 %v1115
    %1674 = vmatprep.subr.bf16.mxu0 %v1124
    %1675 = vmatpush1.bf16.msra.mxu0 %v1123
    %1676 = vmatprep.subr.bf16.mxu0 %v1132
    %1677 = vmatpush1.bf16.msra.mxu0 %v1131
    %1678 = vmatprep.subr.bf16.mxu0 %v1140
    %1679 = vmatpush1.bf16.msra.mxu0 %v1139
    %1680 = vmatprep.subr.bf16.mxu0 %v1148
    %1681 = vmatpush1.bf16.msra.mxu0 %v1147
    %1682 = vmatprep.subr.bf16.mxu0 %v1156
    %1683 = vmatpush1.bf16.msra.mxu0 %v1155
    %1684 = vmatprep.subr.bf16.mxu0 %v1164
    %1685 = vmatpush1.bf16.msra.mxu0 %v1163
    %1686 = vmatprep.subr.bf16.mxu0 %v1172
    %1687 = vmatpush1.bf16.msra.mxu0 %v1171
    %1688 = vmatprep.subr.bf16.mxu0 %v1180
    %1689 = vmatpush1.bf16.msra.mxu0 %v1179
    %1690 = vmatprep.subr.bf16.mxu0 %v1188
    %1691 = vmatpush1.bf16.msra.mxu0 %v1187
    %1692 = vmatprep.subr.bf16.mxu0 %v1196
    %1693 = vmatpush1.bf16.msra.mxu0 %v1195
    %1694 = vmatprep.subr.bf16.mxu0 %v1204
    %1695 = vmatpush1.bf16.msra.mxu0 %v1203
    %1696 = vmatprep.subr.bf16.mxu0 %v1212
    %1697 = vmatpush1.bf16.msra.mxu0 %v1211
    %1698 = vmatprep.mubr.bf16.mxu0 %v702
    %1699 = vmatmul.mubr.bf16.gmra.mrb[0].mxu0 %v701
    %v1700 = vpop.f32.mrb[0].mxu0
    %v1701 = vadd.f32 %v1660, %v1700
    %v1702 = vpop.f32.mrb[0].mxu0
    %v1703 = vadd.f32 %v1662, %v1702
    %v1704 = vpop.f32.mrb[0].mxu0
    %v1705 = vpop.f32.mrb[0].mxu0
    %1706 = vdwg.mxu0
    %1707 = vmatprep.subr.bf16.mxu0 %v710
    %1708 = vmatpush1.bf16.msra.mxu0 %v709
    %1709 = vmatprep.subr.bf16.mxu0 %v718
    %1710 = vmatpush1.bf16.msra.mxu0 %v717
    %1711 = vmatprep.subr.bf16.mxu0 %v726
    %1712 = vmatpush1.bf16.msra.mxu0 %v725
    %1713 = vmatprep.subr.bf16.mxu0 %v734
    %1714 = vmatpush1.bf16.msra.mxu0 %v733
    %1715 = vmatprep.subr.bf16.mxu0 %v742
    %1716 = vmatpush1.bf16.msra.mxu0 %v741
    %1717 = vmatprep.subr.bf16.mxu0 %v750
    %1718 = vmatpush1.bf16.msra.mxu0 %v749
    %1719 = vmatprep.subr.bf16.mxu0 %v758
    %1720 = vmatpush1.bf16.msra.mxu0 %v757
    %1721 = vmatprep.subr.bf16.mxu0 %v766
    %1722 = vmatpush1.bf16.msra.mxu0 %v765
    %1723 = vmatprep.subr.bf16.mxu0 %v774
    %1724 = vmatpush1.bf16.msra.mxu0 %v773
    %1725 = vmatprep.subr.bf16.mxu0 %v782
    %1726 = vmatpush1.bf16.msra.mxu0 %v781
    %1727 = vmatprep.subr.bf16.mxu0 %v790
    %1728 = vmatpush1.bf16.msra.mxu0 %v789
    %1729 = vmatprep.subr.bf16.mxu0 %v798
    %1730 = vmatpush1.bf16.msra.mxu0 %v797
    %1731 = vmatprep.subr.bf16.mxu0 %v806
    %1732 = vmatpush1.bf16.msra.mxu0 %v805
    %1733 = vmatprep.subr.bf16.mxu0 %v814
    %1734 = vmatpush1.bf16.msra.mxu0 %v813
    %1735 = vmatprep.subr.bf16.mxu0 %v822
    %1736 = vmatpush1.bf16.msra.mxu0 %v821
    %1737 = vmatprep.subr.bf16.mxu0 %v830
    %1738 = vmatpush1.bf16.msra.mxu0 %v829
    %1739 = vmatprep.mubr.bf16.mxu0 %v696
    %1740 = vmatmul.mubr.bf16.gmra.mrb[0].mxu0 %v695
    %v1741 = vpop.f32.mrb[0].mxu0
    %v1742 = vadd.f32 0.0, %v1741
    %v1743 = vpop.f32.mrb[0].mxu0
    %v1744 = vadd.f32 0.0, %v1743
    %v1745 = vpop.f32.mrb[0].mxu0
    %v1746 = vpop.f32.mrb[0].mxu0
    %1747 = vdwg.mxu0
    %1748 = vmatprep.subr.bf16.mxu0 %v838
    %1749 = vmatpush1.bf16.msra.mxu0 %v837
    %1750 = vmatprep.subr.bf16.mxu0 %v846
    %1751 = vmatpush1.bf16.msra.mxu0 %v845
    %1752 = vmatprep.subr.bf16.mxu0 %v854
    %1753 = vmatpush1.bf16.msra.mxu0 %v853
    %1754 = vmatprep.subr.bf16.mxu0 %v862
    %1755 = vmatpush1.bf16.msra.mxu0 %v861
    %1756 = vmatprep.subr.bf16.mxu0 %v870
    %1757 = vmatpush1.bf16.msra.mxu0 %v869
    %1758 = vmatprep.subr.bf16.mxu0 %v878
    %1759 = vmatpush1.bf16.msra.mxu0 %v877
    %1760 = vmatprep.subr.bf16.mxu0 %v886
    %1761 = vmatpush1.bf16.msra.mxu0 %v885
    %1762 = vmatprep.subr.bf16.mxu0 %v894
    %1763 = vmatpush1.bf16.msra.mxu0 %v893
    %1764 = vmatprep.subr.bf16.mxu0 %v902
    %1765 = vmatpush1.bf16.msra.mxu0 %v901
    %1766 = vmatprep.subr.bf16.mxu0 %v910
    %1767 = vmatpush1.bf16.msra.mxu0 %v909
    %1768 = vmatprep.subr.bf16.mxu0 %v918
    %1769 = vmatpush1.bf16.msra.mxu0 %v917
    %1770 = vmatprep.subr.bf16.mxu0 %v926
    %1771 = vmatpush1.bf16.msra.mxu0 %v925
    %1772 = vmatprep.subr.bf16.mxu0 %v934
    %1773 = vmatpush1.bf16.msra.mxu0 %v933
    %1774 = vmatprep.subr.bf16.mxu0 %v942
    %1775 = vmatpush1.bf16.msra.mxu0 %v941
    %1776 = vmatprep.subr.bf16.mxu0 %v950
    %1777 = vmatpush1.bf16.msra.mxu0 %v949
    %1778 = vmatprep.subr.bf16.mxu0 %v958
    %1779 = vmatpush1.bf16.msra.mxu0 %v957
    %1780 = vmatprep.mubr.bf16.mxu0 %v698
    %1781 = vmatmul.mubr.bf16.gmra.mrb[0].mxu0 %v697
    %v1782 = vpop.f32.mrb[0].mxu0
    %v1783 = vadd.f32 %v1742, %v1782
    %v1784 = vpop.f32.mrb[0].mxu0
    %v1785 = vadd.f32 %v1744, %v1784
    %v1786 = vpop.f32.mrb[0].mxu0
    %v1787 = vpop.f32.mrb[0].mxu0
    %1788 = vdwg.mxu0
    %1789 = vmatprep.subr.bf16.mxu0 %v966
    %1790 = vmatpush1.bf16.msra.mxu0 %v965
    %1791 = vmatprep.subr.bf16.mxu0 %v974
    %1792 = vmatpush1.bf16.msra.mxu0 %v973
    %1793 = vmatprep.subr.bf16.mxu0 %v982
    %1794 = vmatpush1.bf16.msra.mxu0 %v981
    %1795 = vmatprep.subr.bf16.mxu0 %v990
    %1796 = vmatpush1.bf16.msra.mxu0 %v989
    %1797 = vmatprep.subr.bf16.mxu0 %v998
    %1798 = vmatpush1.bf16.msra.mxu0 %v997
    %1799 = vmatprep.subr.bf16.mxu0 %v1006
    %1800 = vmatpush1.bf16.msra.mxu0 %v1005
    %1801 = vmatprep.subr.bf16.mxu0 %v1014
    %1802 = vmatpush1.bf16.msra.mxu0 %v1013
    %1803 = vmatprep.subr.bf16.mxu0 %v1022
    %1804 = vmatpush1.bf16.msra.mxu0 %v1021
    %1805 = vmatprep.subr.bf16.mxu0 %v1030
    %1806 = vmatpush1.bf16.msra.mxu0 %v1029
    %1807 = vmatprep.subr.bf16.mxu0 %v1038
    %1808 = vmatpush1.bf16.msra.mxu0 %v1037
    %1809 = vmatprep.subr.bf16.mxu0 %v1046
    %1810 = vmatpush1.bf16.msra.mxu0 %v1045
    %1811 = vmatprep.subr.bf16.mxu0 %v1054
    %1812 = vmatpush1.bf16.msra.mxu0 %v1053
    %1813 = vmatprep.subr.bf16.mxu0 %v1062
    %1814 = vmatpush1.bf16.msra.mxu0 %v1061
    %1815 = vmatprep.subr.bf16.mxu0 %v1070
    %1816 = vmatpush1.bf16.msra.mxu0 %v1069
    %1817 = vmatprep.subr.bf16.mxu0 %v1078
    %1818 = vmatpush1.bf16.msra.mxu0 %v1077
    %1819 = vmatprep.subr.bf16.mxu0 %v1086
    %1820 = vmatpush1.bf16.msra.mxu0 %v1085
    %1821 = vmatprep.mubr.bf16.mxu0 %v700
    %1822 = vmatmul.mubr.bf16.gmra.mrb[0].mxu0 %v699
    %v1823 = vpop.f32.mrb[0].mxu0
    %v1824 = vadd.f32 %v1783, %v1823
    %v1825 = vpop.f32.mrb[0].mxu0
    %v1826 = vadd.f32 %v1785, %v1825
    %v1827 = vpop.f32.mrb[0].mxu0
    %v1828 = vpop.f32.mrb[0].mxu0
    %1829 = vdwg.mxu0
    %1830 = vmatprep.subr.bf16.mxu0 %v1094
    %1831 = vmatpush1.bf16.msra.mxu0 %v1093
    %1832 = vmatprep.subr.bf16.mxu0 %v1102
    %1833 = vmatpush1.bf16.msra.mxu0 %v1101
    %1834 = vmatprep.subr.bf16.mxu0 %v1110
    %1835 = vmatpush1.bf16.msra.mxu0 %v1109
    %1836 = vmatprep.subr.bf16.mxu0 %v1118
    %1837 = vmatpush1.bf16.msra.mxu0 %v1117
    %1838 = vmatprep.subr.bf16.mxu0 %v1126
    %1839 = vmatpush1.bf16.msra.mxu0 %v1125
    %1840 = vmatprep.subr.bf16.mxu0 %v1134
    %1841 = vmatpush1.bf16.msra.mxu0 %v1133
    %1842 = vmatprep.subr.bf16.mxu0 %v1142
    %1843 = vmatpush1.bf16.msra.mxu0 %v1141
    %1844 = vmatprep.subr.bf16.mxu0 %v1150
    %1845 = vmatpush1.bf16.msra.mxu0 %v1149
    %1846 = vmatprep.subr.bf16.mxu0 %v1158
    %1847 = vmatpush1.bf16.msra.mxu0 %v1157
    %1848 = vmatprep.subr.bf16.mxu0 %v1166
    %1849 = vmatpush1.bf16.msra.mxu0 %v1165
    %1850 = vmatprep.subr.bf16.mxu0 %v1174
    %1851 = vmatpush1.bf16.msra.mxu0 %v1173
    %1852 = vmatprep.subr.bf16.mxu0 %v1182
    %1853 = vmatpush1.bf16.msra.mxu0 %v1181
    %1854 = vmatprep.subr.bf16.mxu0 %v1190
    %1855 = vmatpush1.bf16.msra.mxu0 %v1189
    %1856 = vmatprep.subr.bf16.mxu0 %v1198
    %1857 = vmatpush1.bf16.msra.mxu0 %v1197
    %1858 = vmatprep.subr.bf16.mxu0 %v1206
    %1859 = vmatpush1.bf16.msra.mxu0 %v1205
    %1860 = vmatprep.subr.bf16.mxu0 %v1214
    %1861 = vmatpush1.bf16.msra.mxu0 %v1213
    %1862 = vmatprep.mubr.bf16.mxu0 %v702
    %1863 = vmatmul.mubr.bf16.gmra.mrb[0].mxu0 %v701
    %v1864 = vpop.f32.mrb[0].mxu0
    %v1865 = vadd.f32 %v1824, %v1864
    %v1866 = vpop.f32.mrb[0].mxu0
    %v1867 = vadd.f32 %v1826, %v1866
    %v1868 = vpop.f32.mrb[0].mxu0
    %v1869 = vpop.f32.mrb[0].mxu0
    %1870 = vdwg.mxu0
    %v1871 = vrot.slane %v1373, 4
    %v1872 = vadd.f32 %v1373, %v1871
    %v1873 = vrot.slane %v1872, 2
    %v1874 = vadd.f32 %v1872, %v1873
    %v1875 = vrot.slane %v1874, 1
    %v1876 = vadd.f32 %v1874, %v1875
    %v1877 = vrot.slane %v1375, 4
    %v1878 = vadd.f32 %v1375, %v1877
    %v1879 = vrot.slane %v1878, 2
    %v1880 = vadd.f32 %v1878, %v1879
    %v1881 = vrot.slane %v1880, 1
    %v1882 = vadd.f32 %v1880, %v1881
    %v1883 = vrot.slane %v1537, 4
    %v1884 = vadd.f32 %v1537, %v1883
    %v1885 = vrot.slane %v1884, 2
    %v1886 = vadd.f32 %v1884, %v1885
    %v1887 = vrot.slane %v1886, 1
    %v1888 = vadd.f32 %v1886, %v1887
    %v1889 = vrot.slane %v1539, 4
    %v1890 = vadd.f32 %v1539, %v1889
    %v1891 = vrot.slane %v1890, 2
    %v1892 = vadd.f32 %v1890, %v1891
    %v1893 = vrot.slane %v1892, 1
    %v1894 = vadd.f32 %v1892, %v1893
    %v1895 = vrot.slane %v1701, 4
    %v1896 = vadd.f32 %v1701, %v1895
    %v1897 = vrot.slane %v1896, 2
    %v1898 = vadd.f32 %v1896, %v1897
    %v1899 = vrot.slane %v1898, 1
    %v1900 = vadd.f32 %v1898, %v1899
    %v1901 = vrot.slane %v1703, 4
    %v1902 = vadd.f32 %v1703, %v1901
    %v1903 = vrot.slane %v1902, 2
    %v1904 = vadd.f32 %v1902, %v1903
    %v1905 = vrot.slane %v1904, 1
    %v1906 = vadd.f32 %v1904, %v1905
    %v1907 = vrot.slane %v1865, 4
    %v1908 = vadd.f32 %v1865, %v1907
    %v1909 = vrot.slane %v1908, 2
    %v1910 = vadd.f32 %v1908, %v1909
    %v1911 = vrot.slane %v1910, 1
    %v1912 = vadd.f32 %v1910, %v1911
    %v1913 = vrot.slane %v1867, 4
    %v1914 = vadd.f32 %v1867, %v1913
    %v1915 = vrot.slane %v1914, 2
    %v1916 = vadd.f32 %v1914, %v1915
    %v1917 = vrot.slane %v1916, 1
    %v1918 = vadd.f32 %v1916, %v1917
    %v1919 = vmul.f32 %v1876, %v432
    %v1920 = vmul.f32 %v1882, %v432
    %v1921 = vmul.f32 %v1888, %v432
    %v1922 = vmul.f32 %v1894, %v432
    %v1923 = vmul.f32 %v1900, %v432
    %v1924 = vmul.f32 %v1906, %v432
    %v1925 = vmul.f32 %v1912, %v432
    %v1926 = vmul.f32 %v1918, %v432
    %v1927 = vmul.f32 %v1373, %v1373
    %v1928 = vmul.f32 %v1375, %v1375
    %v1929 = vmul.f32 %v1537, %v1537
    %v1930 = vmul.f32 %v1539, %v1539
    %v1931 = vmul.f32 %v1701, %v1701
    %v1932 = vmul.f32 %v1703, %v1703
    %v1933 = vmul.f32 %v1865, %v1865
    %v1934 = vmul.f32 %v1867, %v1867
    %v1935 = vrot.slane %v1927, 4
    %v1936 = vadd.f32 %v1927, %v1935
    %v1937 = vrot.slane %v1936, 2
    %v1938 = vadd.f32 %v1936, %v1937
    %v1939 = vrot.slane %v1938, 1
    %v1940 = vadd.f32 %v1938, %v1939
    %v1941 = vrot.slane %v1928, 4
    %v1942 = vadd.f32 %v1928, %v1941
    %v1943 = vrot.slane %v1942, 2
    %v1944 = vadd.f32 %v1942, %v1943
    %v1945 = vrot.slane %v1944, 1
    %v1946 = vadd.f32 %v1944, %v1945
    %v1947 = vrot.slane %v1929, 4
    %v1948 = vadd.f32 %v1929, %v1947
    %v1949 = vrot.slane %v1948, 2
    %v1950 = vadd.f32 %v1948, %v1949
    %v1951 = vrot.slane %v1950, 1
    %v1952 = vadd.f32 %v1950, %v1951
    %v1953 = vrot.slane %v1930, 4
    %v1954 = vadd.f32 %v1930, %v1953
    %v1955 = vrot.slane %v1954, 2
    %v1956 = vadd.f32 %v1954, %v1955
    %v1957 = vrot.slane %v1956, 1
    %v1958 = vadd.f32 %v1956, %v1957
    %v1959 = vrot.slane %v1931, 4
    %v1960 = vadd.f32 %v1931, %v1959
    %v1961 = vrot.slane %v1960, 2
    %v1962 = vadd.f32 %v1960, %v1961
    %v1963 = vrot.slane %v1962, 1
    %v1964 = vadd.f32 %v1962, %v1963
    %v1965 = vrot.slane %v1932, 4
    %v1966 = vadd.f32 %v1932, %v1965
    %v1967 = vrot.slane %v1966, 2
    %v1968 = vadd.f32 %v1966, %v1967
    %v1969 = vrot.slane %v1968, 1
    %v1970 = vadd.f32 %v1968, %v1969
    %v1971 = vrot.slane %v1933, 4
    %v1972 = vadd.f32 %v1933, %v1971
    %v1973 = vrot.slane %v1972, 2
    %v1974 = vadd.f32 %v1972, %v1973
    %v1975 = vrot.slane %v1974, 1
    %v1976 = vadd.f32 %v1974, %v1975
    %v1977 = vrot.slane %v1934, 4
    %v1978 = vadd.f32 %v1934, %v1977
    %v1979 = vrot.slane %v1978, 2
    %v1980 = vadd.f32 %v1978, %v1979
    %v1981 = vrot.slane %v1980, 1
    %v1982 = vadd.f32 %v1980, %v1981
    %v1983 = vmul.f32 %v1940, %v432
    %v1984 = vmul.f32 %v1946, %v432
    %v1985 = vmul.f32 %v1952, %v432
    %v1986 = vmul.f32 %v1958, %v432
    %v1987 = vmul.f32 %v1964, %v432
    %v1988 = vmul.f32 %v1970, %v432
    %v1989 = vmul.f32 %v1976, %v432
    %v1990 = vmul.f32 %v1982, %v432
    %v1991 = vmul.f32 %v1919, %v1919
    %v1992 = vmul.f32 %v1920, %v1920
    %v1993 = vmul.f32 %v1921, %v1921
    %v1994 = vmul.f32 %v1922, %v1922
    %v1995 = vmul.f32 %v1923, %v1923
    %v1996 = vmul.f32 %v1924, %v1924
    %v1997 = vmul.f32 %v1925, %v1925
    %v1998 = vmul.f32 %v1926, %v1926
    %v1999 = vsub.f32 %v1983, %v1991
    %v2000 = vsub.f32 %v1984, %v1992
    %v2001 = vsub.f32 %v1985, %v1993
    %v2002 = vsub.f32 %v1986, %v1994
    %v2003 = vsub.f32 %v1987, %v1995
    %v2004 = vsub.f32 %v1988, %v1996
    %v2005 = vsub.f32 %v1989, %v1997
    %v2006 = vsub.f32 %v1990, %v1998
    %v2007 = vsub.f32 %v1373, %v1919
    %v2008 = vsub.f32 %v1375, %v1920
    %v2009 = vsub.f32 %v1537, %v1921
    %v2010 = vsub.f32 %v1539, %v1922
    %v2011 = vsub.f32 %v1701, %v1923
    %v2012 = vsub.f32 %v1703, %v1924
    %v2013 = vsub.f32 %v1865, %v1925
    %v2014 = vsub.f32 %v1867, %v1926
    %v2015 = vadd.f32 %v1999, 1e-05
    %v2016 = vadd.f32 %v2000, 1e-05
    %v2017 = vadd.f32 %v2001, 1e-05
    %v2018 = vadd.f32 %v2002, 1e-05
    %v2019 = vadd.f32 %v2003, 1e-05
    %v2020 = vadd.f32 %v2004, 1e-05
    %v2021 = vadd.f32 %v2005, 1e-05
    %v2022 = vadd.f32 %v2006, 1e-05
    %v2023 = vrsqrt.pop %v2015
    %v2024 = vrsqrt.pop %v2016
    %v2025 = vrsqrt.pop %v2017
    %v2026 = vrsqrt.pop %v2018
    %v2027 = vrsqrt.pop %v2019
    %v2028 = vrsqrt.pop %v2020
    %v2029 = vrsqrt.pop %v2021
    %v2030 = vrsqrt.pop %v2022
    %v2032 = vlaneseq
    %v2033 = vshrl.u32 %v2032, 7
    %v2034 = vsub.s32 0, %v2033
    %v2035 = vrot.slane %v114, %v2034
    %v2036 = vlaneseq
    %v2037 = vshrl.u32 %v2036, 7
    %v2038 = vsub.s32 1, %v2037
    %v2039 = vrot.slane %v114, %v2038
    %v2040 = vlaneseq
    %v2041 = vshrl.u32 %v2040, 7
    %v2042 = vsub.s32 2, %v2041
    %v2043 = vrot.slane %v114, %v2042
    %v2044 = vlaneseq
    %v2045 = vshrl.u32 %v2044, 7
    %v2046 = vsub.s32 3, %v2045
    %v2047 = vrot.slane %v114, %v2046
    %v2048 = vlaneseq
    %v2049 = vshrl.u32 %v2048, 7
    %v2050 = vsub.s32 4, %v2049
    %v2051 = vrot.slane %v114, %v2050
    %v2052 = vlaneseq
    %v2053 = vshrl.u32 %v2052, 7
    %v2054 = vsub.s32 5, %v2053
    %v2055 = vrot.slane %v114, %v2054
    %v2056 = vlaneseq
    %v2057 = vshrl.u32 %v2056, 7
    %v2058 = vsub.s32 6, %v2057
    %v2059 = vrot.slane %v114, %v2058
    %v2060 = vlaneseq
    %v2061 = vshrl.u32 %v2060, 7
    %v2062 = vsub.s32 7, %v2061
    %v2063 = vrot.slane %v114, %v2062
    %v2072 = vmul.f32 %v2023, %v2035
    %v2073 = vmul.f32 %v2024, %v2039
    %v2074 = vmul.f32 %v2025, %v2043
    %v2075 = vmul.f32 %v2026, %v2047
    %v2076 = vmul.f32 %v2027, %v2051
    %v2077 = vmul.f32 %v2028, %v2055
    %v2078 = vmul.f32 %v2029, %v2059
    %v2079 = vmul.f32 %v2030, %v2063
    %v2080 = vlaneseq
    %v2081 = vshrl.u32 %v2080, 7
    %v2082 = vsub.s32 0, %v2081
    %v2083 = vrot.slane %v2072, %v2082
    %v2084 = vlaneseq
    %v2085 = vshrl.u32 %v2084, 7
    %v2086 = vsub.s32 0, %v2085
    %v2087 = vrot.slane %v2073, %v2086
    %v2088 = vlaneseq
    %v2089 = vshrl.u32 %v2088, 7
    %v2090 = vsub.s32 0, %v2089
    %v2091 = vrot.slane %v2074, %v2090
    %v2092 = vlaneseq
    %v2093 = vshrl.u32 %v2092, 7
    %v2094 = vsub.s32 0, %v2093
    %v2095 = vrot.slane %v2075, %v2094
    %v2096 = vlaneseq
    %v2097 = vshrl.u32 %v2096, 7
    %v2098 = vsub.s32 0, %v2097
    %v2099 = vrot.slane %v2076, %v2098
    %v2100 = vlaneseq
    %v2101 = vshrl.u32 %v2100, 7
    %v2102 = vsub.s32 0, %v2101
    %v2103 = vrot.slane %v2077, %v2102
    %v2104 = vlaneseq
    %v2105 = vshrl.u32 %v2104, 7
    %v2106 = vsub.s32 0, %v2105
    %v2107 = vrot.slane %v2078, %v2106
    %v2108 = vlaneseq
    %v2109 = vshrl.u32 %v2108, 7
    %v2110 = vsub.s32 0, %v2109
    %v2111 = vrot.slane %v2079, %v2110
    %v2112 = vmul.f32 %v2007, %v2083
    %v2113 = vmul.f32 %v2008, %v2087
    %v2114 = vmul.f32 %v2009, %v2091
    %v2115 = vmul.f32 %v2010, %v2095
    %v2116 = vmul.f32 %v2011, %v2099
    %v2117 = vmul.f32 %v2012, %v2103
    %v2118 = vmul.f32 %v2013, %v2107
    %v2119 = vmul.f32 %v2014, %v2111
    %v2121 = vlaneseq
    %v2122 = vshrl.u32 %v2121, 7
    %v2123 = vsub.s32 0, %v2122
    %v2124 = vrot.slane %v118, %v2123
    %v2125 = vlaneseq
    %v2126 = vshrl.u32 %v2125, 7
    %v2127 = vsub.s32 1, %v2126
    %v2128 = vrot.slane %v118, %v2127
    %v2129 = vlaneseq
    %v2130 = vshrl.u32 %v2129, 7
    %v2131 = vsub.s32 2, %v2130
    %v2132 = vrot.slane %v118, %v2131
    %v2133 = vlaneseq
    %v2134 = vshrl.u32 %v2133, 7
    %v2135 = vsub.s32 3, %v2134
    %v2136 = vrot.slane %v118, %v2135
    %v2137 = vlaneseq
    %v2138 = vshrl.u32 %v2137, 7
    %v2139 = vsub.s32 4, %v2138
    %v2140 = vrot.slane %v118, %v2139
    %v2141 = vlaneseq
    %v2142 = vshrl.u32 %v2141, 7
    %v2143 = vsub.s32 5, %v2142
    %v2144 = vrot.slane %v118, %v2143
    %v2145 = vlaneseq
    %v2146 = vshrl.u32 %v2145, 7
    %v2147 = vsub.s32 6, %v2146
    %v2148 = vrot.slane %v118, %v2147
    %v2149 = vlaneseq
    %v2150 = vshrl.u32 %v2149, 7
    %v2151 = vsub.s32 7, %v2150
    %v2152 = vrot.slane %v118, %v2151
    %v2161 = vadd.f32 %v2112, %v2124
    %v2162 = vadd.f32 %v2113, %v2128
    %v2163 = vadd.f32 %v2114, %v2132
    %v2164 = vadd.f32 %v2115, %v2136
    %v2165 = vadd.f32 %v2116, %v2140
    %v2166 = vadd.f32 %v2117, %v2144
    %v2167 = vadd.f32 %v2118, %v2148
    %v2168 = vadd.f32 %v2119, %v2152
    %v2169 = vmax.f32 %v2161, 0.0
    %v2170 = vmax.f32 %v2162, 0.0
    %v2171 = vmax.f32 %v2163, 0.0
    %v2172 = vmax.f32 %v2164, 0.0
    %v2173 = vmax.f32 %v2165, 0.0
    %v2174 = vmax.f32 %v2166, 0.0
    %v2175 = vmax.f32 %v2167, 0.0
    %v2176 = vmax.f32 %v2168, 0.0
    %s2177 = smul.u32 %s691, 1
    %s2178 = sshll.u32 %s2177, 4
    %2179 = dma.done %s90, %s2178
    %v2180 = vpack.c.bf16 %v2169, %v2169
    %v2181 = vpack.c.bf16 %v2170, %v2170
    %v2182 = vpack.c.bf16 %v2171, %v2171
    %v2183 = vpack.c.bf16 %v2172, %v2172
    %v2184 = vpack.c.bf16 %v2173, %v2173
    %v2185 = vpack.c.bf16 %v2174, %v2174
    %v2186 = vpack.c.bf16 %v2175, %v2175
    %v2187 = vpack.c.bf16 %v2176, %v2176
    %v2188 = vld [vmem:[#allocation3] sm:$0xff]
    %v2189 = vld [vmem:[#allocation3 + $0x8] sm:$0xff]
    %v2190 = vld [vmem:[#allocation3 + $0x10] sm:$0xff]
    %v2191 = vld [vmem:[#allocation3 + $0x18] sm:$0xff]
    %v2192 = vld [vmem:[#allocation3 + $0x20] sm:$0xff]
    %v2193 = vld [vmem:[#allocation3 + $0x28] sm:$0xff]
    %v2194 = vld [vmem:[#allocation3 + $0x30] sm:$0xff]
    %v2195 = vld [vmem:[#allocation3 + $0x38] sm:$0xff]
    %v2196 = vld [vmem:[#allocation3 + $0x40] sm:$0xff]
    %v2197 = vld [vmem:[#allocation3 + $0x48] sm:$0xff]
    %v2198 = vld [vmem:[#allocation3 + $0x50] sm:$0xff]
    %v2199 = vld [vmem:[#allocation3 + $0x58] sm:$0xff]
    %v2200 = vld [vmem:[#allocation3 + $0x60] sm:$0xff]
    %v2201 = vld [vmem:[#allocation3 + $0x68] sm:$0xff]
    %v2202 = vld [vmem:[#allocation3 + $0x70] sm:$0xff]
    %v2203 = vld [vmem:[#allocation3 + $0x78] sm:$0xff]
    %v2204 = vld [vmem:[#allocation3 + $0x80] sm:$0xff]
    %v2205 = vld [vmem:[#allocation3 + $0x88] sm:$0xff]
    %v2206 = vld [vmem:[#allocation3 + $0x90] sm:$0xff]
    %v2207 = vld [vmem:[#allocation3 + $0x98] sm:$0xff]
    %v2208 = vld [vmem:[#allocation3 + $0xa0] sm:$0xff]
    %v2209 = vld [vmem:[#allocation3 + $0xa8] sm:$0xff]
    %v2210 = vld [vmem:[#allocation3 + $0xb0] sm:$0xff]
    %v2211 = vld [vmem:[#allocation3 + $0xb8] sm:$0xff]
    %v2212 = vld [vmem:[#allocation3 + $0xc0] sm:$0xff]
    %v2213 = vld [vmem:[#allocation3 + $0xc8] sm:$0xff]
    %v2214 = vld [vmem:[#allocation3 + $0xd0] sm:$0xff]
    %v2215 = vld [vmem:[#allocation3 + $0xd8] sm:$0xff]
    %v2216 = vld [vmem:[#allocation3 + $0xe0] sm:$0xff]
    %v2217 = vld [vmem:[#allocation3 + $0xe8] sm:$0xff]
    %v2218 = vld [vmem:[#allocation3 + $0xf0] sm:$0xff]
    %v2219 = vld [vmem:[#allocation3 + $0xf8] sm:$0xff]
    %v2220 = vld [vmem:[#allocation3 + $0x100] sm:$0xff]
    %v2221 = vld [vmem:[#allocation3 + $0x108] sm:$0xff]
    %v2222 = vld [vmem:[#allocation3 + $0x110] sm:$0xff]
    %v2223 = vld [vmem:[#allocation3 + $0x118] sm:$0xff]
    %v2224 = vld [vmem:[#allocation3 + $0x120] sm:$0xff]
    %v2225 = vld [vmem:[#allocation3 + $0x128] sm:$0xff]
    %v2226 = vld [vmem:[#allocation3 + $0x130] sm:$0xff]
    %v2227 = vld [vmem:[#allocation3 + $0x138] sm:$0xff]
    %v2228 = vld [vmem:[#allocation3 + $0x140] sm:$0xff]
    %v2229 = vld [vmem:[#allocation3 + $0x148] sm:$0xff]
    %v2230 = vld [vmem:[#allocation3 + $0x150] sm:$0xff]
    %v2231 = vld [vmem:[#allocation3 + $0x158] sm:$0xff]
    %v2232 = vld [vmem:[#allocation3 + $0x160] sm:$0xff]
    %v2233 = vld [vmem:[#allocation3 + $0x168] sm:$0xff]
    %v2234 = vld [vmem:[#allocation3 + $0x170] sm:$0xff]
    %v2235 = vld [vmem:[#allocation3 + $0x178] sm:$0xff]
    %v2236 = vld [vmem:[#allocation3 + $0x180] sm:$0xff]
    %v2237 = vld [vmem:[#allocation3 + $0x188] sm:$0xff]
    %v2238 = vld [vmem:[#allocation3 + $0x190] sm:$0xff]
    %v2239 = vld [vmem:[#allocation3 + $0x198] sm:$0xff]
    %v2240 = vld [vmem:[#allocation3 + $0x1a0] sm:$0xff]
    %v2241 = vld [vmem:[#allocation3 + $0x1a8] sm:$0xff]
    %v2242 = vld [vmem:[#allocation3 + $0x1b0] sm:$0xff]
    %v2243 = vld [vmem:[#allocation3 + $0x1b8] sm:$0xff]
    %v2244 = vld [vmem:[#allocation3 + $0x1c0] sm:$0xff]
    %v2245 = vld [vmem:[#allocation3 + $0x1c8] sm:$0xff]
    %v2246 = vld [vmem:[#allocation3 + $0x1d0] sm:$0xff]
    %v2247 = vld [vmem:[#allocation3 + $0x1d8] sm:$0xff]
    %v2248 = vld [vmem:[#allocation3 + $0x1e0] sm:$0xff]
    %v2249 = vld [vmem:[#allocation3 + $0x1e8] sm:$0xff]
    %v2250 = vld [vmem:[#allocation3 + $0x1f0] sm:$0xff]
    %v2251 = vld [vmem:[#allocation3 + $0x1f8] sm:$0xff]
    %2252 = vmatprep.subr.bf16.mxu0 0
    %2253 = vmatpush1.bf16.msra.mxu0 %v2188
    %2254 = vmatprep.subr.bf16.mxu0 0
    %2255 = vmatpush1.bf16.msra.mxu0 %v2189
    %2256 = vmatprep.subr.bf16.mxu0 0
    %2257 = vmatpush1.bf16.msra.mxu0 %v2190
    %2258 = vmatprep.subr.bf16.mxu0 0
    %2259 = vmatpush1.bf16.msra.mxu0 %v2191
    %2260 = vmatprep.subr.bf16.mxu0 0
    %2261 = vmatpush1.bf16.msra.mxu0 %v2192
    %2262 = vmatprep.subr.bf16.mxu0 0
    %2263 = vmatpush1.bf16.msra.mxu0 %v2193
    %2264 = vmatprep.subr.bf16.mxu0 0
    %2265 = vmatpush1.bf16.msra.mxu0 %v2194
    %2266 = vmatprep.subr.bf16.mxu0 0
    %2267 = vmatpush1.bf16.msra.mxu0 %v2195
    %2268 = vmatprep.subr.bf16.mxu0 0
    %2269 = vmatpush1.bf16.msra.mxu0 %v2196
    %2270 = vmatprep.subr.bf16.mxu0 0
    %2271 = vmatpush1.bf16.msra.mxu0 %v2197
    %2272 = vmatprep.subr.bf16.mxu0 0
    %2273 = vmatpush1.bf16.msra.mxu0 %v2198
    %2274 = vmatprep.subr.bf16.mxu0 0
    %2275 = vmatpush1.bf16.msra.mxu0 %v2199
    %2276 = vmatprep.subr.bf16.mxu0 0
    %2277 = vmatpush1.bf16.msra.mxu0 %v2200
    %2278 = vmatprep.subr.bf16.mxu0 0
    %2279 = vmatpush1.bf16.msra.mxu0 %v2201
    %2280 = vmatprep.subr.bf16.mxu0 0
    %2281 = vmatpush1.bf16.msra.mxu0 %v2202
    %2282 = vmatprep.subr.bf16.mxu0 0
    %2283 = vmatpush1.bf16.msra.mxu0 %v2203
    %2284 = vmatprep.mubr.bf16.mxu0 %v2181
    %2285 = vmatmul.mubr.bf16.gmra.mrb[0].mxu0 %v2180
    %v2286 = vpop.f32.mrb[0].mxu0
    %v2287 = vadd.f32 %v119, %v2286
    %v2288 = vpop.f32.mrb[0].mxu0
    %v2289 = vpop.f32.mrb[0].mxu0
    %v2290 = vpop.f32.mrb[0].mxu0
    %2291 = vdwg.mxu0
    %2292 = vmatprep.subr.bf16.mxu0 0
    %2293 = vmatpush1.bf16.msra.mxu0 %v2204
    %2294 = vmatprep.subr.bf16.mxu0 0
    %2295 = vmatpush1.bf16.msra.mxu0 %v2205
    %2296 = vmatprep.subr.bf16.mxu0 0
    %2297 = vmatpush1.bf16.msra.mxu0 %v2206
    %2298 = vmatprep.subr.bf16.mxu0 0
    %2299 = vmatpush1.bf16.msra.mxu0 %v2207
    %2300 = vmatprep.subr.bf16.mxu0 0
    %2301 = vmatpush1.bf16.msra.mxu0 %v2208
    %2302 = vmatprep.subr.bf16.mxu0 0
    %2303 = vmatpush1.bf16.msra.mxu0 %v2209
    %2304 = vmatprep.subr.bf16.mxu0 0
    %2305 = vmatpush1.bf16.msra.mxu0 %v2210
    %2306 = vmatprep.subr.bf16.mxu0 0
    %2307 = vmatpush1.bf16.msra.mxu0 %v2211
    %2308 = vmatprep.subr.bf16.mxu0 0
    %2309 = vmatpush1.bf16.msra.mxu0 %v2212
    %2310 = vmatprep.subr.bf16.mxu0 0
    %2311 = vmatpush1.bf16.msra.mxu0 %v2213
    %2312 = vmatprep.subr.bf16.mxu0 0
    %2313 = vmatpush1.bf16.msra.mxu0 %v2214
    %2314 = vmatprep.subr.bf16.mxu0 0
    %2315 = vmatpush1.bf16.msra.mxu0 %v2215
    %2316 = vmatprep.subr.bf16.mxu0 0
    %2317 = vmatpush1.bf16.msra.mxu0 %v2216
    %2318 = vmatprep.subr.bf16.mxu0 0
    %2319 = vmatpush1.bf16.msra.mxu0 %v2217
    %2320 = vmatprep.subr.bf16.mxu0 0
    %2321 = vmatpush1.bf16.msra.mxu0 %v2218
    %2322 = vmatprep.subr.bf16.mxu0 0
    %2323 = vmatpush1.bf16.msra.mxu0 %v2219
    %2324 = vmatprep.mubr.bf16.mxu0 %v2183
    %2325 = vmatmul.mubr.bf16.gmra.mrb[0].mxu0 %v2182
    %v2326 = vpop.f32.mrb[0].mxu0
    %v2327 = vadd.f32 %v2287, %v2326
    %v2328 = vpop.f32.mrb[0].mxu0
    %v2329 = vpop.f32.mrb[0].mxu0
    %v2330 = vpop.f32.mrb[0].mxu0
    %2331 = vdwg.mxu0
    %2332 = vmatprep.subr.bf16.mxu0 0
    %2333 = vmatpush1.bf16.msra.mxu0 %v2220
    %2334 = vmatprep.subr.bf16.mxu0 0
    %2335 = vmatpush1.bf16.msra.mxu0 %v2221
    %2336 = vmatprep.subr.bf16.mxu0 0
    %2337 = vmatpush1.bf16.msra.mxu0 %v2222
    %2338 = vmatprep.subr.bf16.mxu0 0
    %2339 = vmatpush1.bf16.msra.mxu0 %v2223
    %2340 = vmatprep.subr.bf16.mxu0 0
    %2341 = vmatpush1.bf16.msra.mxu0 %v2224
    %2342 = vmatprep.subr.bf16.mxu0 0
    %2343 = vmatpush1.bf16.msra.mxu0 %v2225
    %2344 = vmatprep.subr.bf16.mxu0 0
    %2345 = vmatpush1.bf16.msra.mxu0 %v2226
    %2346 = vmatprep.subr.bf16.mxu0 0
    %2347 = vmatpush1.bf16.msra.mxu0 %v2227
    %2348 = vmatprep.subr.bf16.mxu0 0
    %2349 = vmatpush1.bf16.msra.mxu0 %v2228
    %2350 = vmatprep.subr.bf16.mxu0 0
    %2351 = vmatpush1.bf16.msra.mxu0 %v2229
    %2352 = vmatprep.subr.bf16.mxu0 0
    %2353 = vmatpush1.bf16.msra.mxu0 %v2230
    %2354 = vmatprep.subr.bf16.mxu0 0
    %2355 = vmatpush1.bf16.msra.mxu0 %v2231
    %2356 = vmatprep.subr.bf16.mxu0 0
    %2357 = vmatpush1.bf16.msra.mxu0 %v2232
    %2358 = vmatprep.subr.bf16.mxu0 0
    %2359 = vmatpush1.bf16.msra.mxu0 %v2233
    %2360 = vmatprep.subr.bf16.mxu0 0
    %2361 = vmatpush1.bf16.msra.mxu0 %v2234
    %2362 = vmatprep.subr.bf16.mxu0 0
    %2363 = vmatpush1.bf16.msra.mxu0 %v2235
    %2364 = vmatprep.mubr.bf16.mxu0 %v2185
    %2365 = vmatmul.mubr.bf16.gmra.mrb[0].mxu0 %v2184
    %v2366 = vpop.f32.mrb[0].mxu0
    %v2367 = vadd.f32 %v2327, %v2366
    %v2368 = vpop.f32.mrb[0].mxu0
    %v2369 = vpop.f32.mrb[0].mxu0
    %v2370 = vpop.f32.mrb[0].mxu0
    %2371 = vdwg.mxu0
    %2372 = vmatprep.subr.bf16.mxu0 0
    %2373 = vmatpush1.bf16.msra.mxu0 %v2236
    %2374 = vmatprep.subr.bf16.mxu0 0
    %2375 = vmatpush1.bf16.msra.mxu0 %v2237
    %2376 = vmatprep.subr.bf16.mxu0 0
    %2377 = vmatpush1.bf16.msra.mxu0 %v2238
    %2378 = vmatprep.subr.bf16.mxu0 0
    %2379 = vmatpush1.bf16.msra.mxu0 %v2239
    %2380 = vmatprep.subr.bf16.mxu0 0
    %2381 = vmatpush1.bf16.msra.mxu0 %v2240
    %2382 = vmatprep.subr.bf16.mxu0 0
    %2383 = vmatpush1.bf16.msra.mxu0 %v2241
    %2384 = vmatprep.subr.bf16.mxu0 0
    %2385 = vmatpush1.bf16.msra.mxu0 %v2242
    %2386 = vmatprep.subr.bf16.mxu0 0
    %2387 = vmatpush1.bf16.msra.mxu0 %v2243
    %2388 = vmatprep.subr.bf16.mxu0 0
    %2389 = vmatpush1.bf16.msra.mxu0 %v2244
    %2390 = vmatprep.subr.bf16.mxu0 0
    %2391 = vmatpush1.bf16.msra.mxu0 %v2245
    %2392 = vmatprep.subr.bf16.mxu0 0
    %2393 = vmatpush1.bf16.msra.mxu0 %v2246
    %2394 = vmatprep.subr.bf16.mxu0 0
    %2395 = vmatpush1.bf16.msra.mxu0 %v2247
    %2396 = vmatprep.subr.bf16.mxu0 0
    %2397 = vmatpush1.bf16.msra.mxu0 %v2248
    %2398 = vmatprep.subr.bf16.mxu0 0
    %2399 = vmatpush1.bf16.msra.mxu0 %v2249
    %2400 = vmatprep.subr.bf16.mxu0 0
    %2401 = vmatpush1.bf16.msra.mxu0 %v2250
    %2402 = vmatprep.subr.bf16.mxu0 0
    %2403 = vmatpush1.bf16.msra.mxu0 %v2251
    %2404 = vmatprep.mubr.bf16.mxu0 %v2187
    %2405 = vmatmul.mubr.bf16.gmra.mrb[0].mxu0 %v2186
    %v2406 = vpop.f32.mrb[0].mxu0
    %v2407 = vadd.f32 %v2367, %v2406
    %v2408 = vpop.f32.mrb[0].mxu0
    %v2409 = vpop.f32.mrb[0].mxu0
    %v2410 = vpop.f32.mrb[0].mxu0
    %2411 = vdwg.mxu0
    %2412 = vst [vmem:[#allocation11] sm:$0xff] %v2407
    // Predicated region
    $region30: #{tpu_custom_call.1} parent=1 // pred_check
      _
    $region31: #{tpu_custom_call.1} parent=1 // pred_check_branch
      %2414 = sbr.rel (0) target = $region33
    $region32: #{tpu_custom_call.1} parent=1 // pred_region
      %s2416 = ssub.s32 128, 128
      %2417 = vsyncadd [#allocation7], %s2416
      %s2419 = sshll.u32 [#allocation11], 4
      %s2420 = int_to_ptr.vmem [resolvable:$true] %s2419
      %2422 = dma.vmem_to_hbm [thread:$0]  %s2420, 128, %s5, [#allocation7]
    $region33: #{tpu_custom_call.1} parent=1 // pred_fallthru
      _
    // Predicated region
    $region34: #{tpu_custom_call.1} parent=1 // pred_check
      _
    $region35: #{tpu_custom_call.1} parent=1 // pred_check_branch
      %2424 = sbr.rel (0) target = $region37
    $region36: #{tpu_custom_call.1} parent=1 // pred_region
      %2425 = dma.done [#allocation7], 128
    $region37: #{tpu_custom_call.1} parent=1 // pred_fallthru
      _
    %2426 = vsyncpa [#allocation6], 1
    %2427 = vsyncpa [#allocation9], 1
    %2428 = vsyncpa [#allocation7], 1
  %2429 = vsyncmov [#allocation4]
  %s2430 = vpop.sfrf %2429
  %p2431 = scmp.eq.s32.totalorder %s2430, 0
  %p2432 = pneg %p2431
  %2434 = shalt.err (%p2432)
  %s2435 = scalar_lea.sflag [#allocation4], 1
  %2436 = vsyncmov %s2435
  %s2437 = vpop.sfrf %2436
  %p2438 = scmp.eq.s32.totalorder %s2437, 0
  %p2439 = pneg %p2438
  %2441 = shalt.err (%p2439)

</llo_original>
